<compile_context>
chip_gen: v6e
topology: v6e:2x2x1
jax: 0.10.0
libtpu: 0.0.40
codegen_flags: <defaults>
</compile_context>

<pallas_src>
import jax
import jax.numpy as jnp
from jax.experimental import pallas as pl
from jax.experimental.pallas import tpu as pltpu


# Multiple of 256 (v6e/v7x MXU), 128 (v5e MXU) and 16 (bf16 sublane packing).
_ALIGN = 256


def _round_up(x, m):
    return (x + m - 1) // m * m


def critic_kernel(state_ref, action_ref, w1s_ref, w1a_ref, b1_ref,
                  w2_ref, b2_ref, w3_ref, b3_ref, w4_ref, b4_ref, o_ref):
    f32 = jnp.float32
    # Layer 1: concat([state, action]) @ W1  ==  state @ W1_s + action @ W1_a
    h = jnp.dot(state_ref[...], w1s_ref[...], preferred_element_type=f32)
    h = h + jnp.dot(action_ref[...], w1a_ref[...], preferred_element_type=f32)
    h = jnp.maximum(h + b1_ref[...], 0.0)                       # bias + ReLU in f32
    # Layer 2
    h = jnp.dot(h.astype(w2_ref.dtype), w2_ref[...], preferred_element_type=f32)
    h = jnp.maximum(h + b2_ref[...], 0.0)
    # Layer 3
    h = jnp.dot(h.astype(w3_ref.dtype), w3_ref[...], preferred_element_type=f32)
    h = jnp.maximum(h + b3_ref[...], 0.0)
    # Head: q[b] = sum_j h[b, j] * w4[0, j] + b4, emitted as a lane-dense
    # (1, TILE_B) row (batch on the lane axis) -> unmasked full-lane stores.
    # NOTE(review): this dot_general contracts rhs dim 1; it lowers and runs
    # cleanly.  If profiling at large H ever shows Mosaic inserting an XLU
    # transpose of the full h tile here, the fallback is jnp.dot(h, w4.(H,1))
    # plus a (TILE_B,1)->(1,TILE_B) relayout of just that column.
    q_row = jax.lax.dot_general(
        w4_ref[...], h.astype(w4_ref.dtype),
        dimension_numbers=(((1,), (1,)), ((), ())),
        preferred_element_type=f32)                             # (1, TILE_B)
    q_row = q_row + b4_ref[0, 0]                                # scalar bias (SMEM)
    o_ref[...] = q_row.reshape(o_ref.shape).astype(o_ref.dtype)


def critic_forward(state, action, params, *, tile_b=512,
                   compute_dtype=jnp.bfloat16):
    """Full Critic MLP in one pallas_call: batch-tiled, weight-resident.

    compute_dtype only affects the MXU operands (weights + activations fed to
    jnp.dot); accumulation, bias adds and ReLU stay float32, so bf16 is safe on
    v5e/v6e/v7x alike.  On v7x keep tile_b such that ~3*tile_b*H*4 B of live
    activations plus the single-buffered weights stays well under 64 MiB.
    """
    w1s, w1a, b1, w2, b2, w3, b3, w4, b4 = params
    B, state_dim = state.shape
    action_dim = action.shape[1]
    H = w2.shape[0]

    # MXU-/bf16-aligned batch tile; prefer >=2 grid steps so both v7x TCs work.
    tile = min(_round_up(tile_b, _ALIGN), _round_up(B, _ALIGN))
    if B > _ALIGN and pl.cdiv(B, tile) < 2:
        tile = _round_up(pl.cdiv(B, 2), _ALIGN)
    num_tiles = pl.cdiv(B, tile)
    b_pad = num_tiles * tile
    if b_pad != B:
        state = jnp.pad(state, ((0, b_pad - B), (0, 0)))
        action = jnp.pad(action, ((0, b_pad - B), (0, 0)))

    cast = lambda a: a.astype(compute_dtype)
    state, action = cast(state), cast(action)
    w1s, w1a, w2, w3, w4 = cast(w1s), cast(w1a), cast(w2), cast(w3), cast(w4)
    b1, b2, b3 = (b1.astype(jnp.float32), b2.astype(jnp.float32),
                  b3.astype(jnp.float32))
    b4 = b4.reshape(1, 1).astype(jnp.float32)                   # scalar -> SMEM

    # --- VMEM accounting: single-buffered weights + double-buffered I/O tiles
    #     + live f32 activations, with ~1.5x headroom. ---
    itemsize = jnp.dtype(compute_dtype).itemsize
    weight_bytes = (sum(int(a.size) for a in (w1s, w1a, w2, w3, w4)) * itemsize
                    + sum(int(a.size) for a in (b1, b2, b3)) * 4)
    io_bytes = 2 * tile * (state_dim + action_dim) * itemsize + 2 * tile * 4
    act_bytes = 3 * tile * H * 4
    vmem_limit = int(1.5 * (weight_bytes + io_bytes + act_bytes)) + (2 << 20)
    vmem_limit = max(8 << 20, min(vmem_limit, 128 << 20))

    # Advisory cost so XLA doesn't schedule this call as zero-cost.
    flops = 2 * b_pad * ((state_dim + action_dim) * H + 2 * H * H + H)
    bytes_accessed = (b_pad * (state_dim + action_dim) * itemsize
                      + weight_bytes + b_pad * 4)
    cost = pl.CostEstimate(flops=flops, transcendentals=0,
                           bytes_accessed=bytes_accessed)

    # Constant-index weights: single-buffer them (default 2-deep pipelining
    # never re-DMAs anyway but allocates 2x VMEM per weight).
    resident = lambda shape: pl.BlockSpec(shape, lambda i: (0, 0),
                                          pipeline_mode=pl.Buffered(1))

    out = pl.pallas_call(
        critic_kernel,
        grid=(num_tiles,),
        in_specs=[
            pl.BlockSpec((tile, state_dim), lambda i: (i, 0)),   # state tile
            pl.BlockSpec((tile, action_dim), lambda i: (i, 0)),  # action tile
            resident((state_dim, H)),                            # W1_state
            resident((action_dim, H)),                           # W1_action
            resident((1, H)),                                    # b1
            resident((H, H)),                                    # W2
            resident((1, H)),                                    # b2
            resident((H, H)),                                    # W3
            resident((1, H)),                                    # b3
            resident((1, H)),                                    # w4 row
            pl.BlockSpec(memory_space=pltpu.MemorySpace.SMEM),   # b4 scalar
        ],
        out_specs=pl.BlockSpec((1, 1, tile), lambda i: (i, 0, 0)),
        out_shape=jax.ShapeDtypeStruct((num_tiles, 1, tile), jnp.float32),
        compiler_params=pltpu.CompilerParams(
            dimension_semantics=("parallel",),
            vmem_limit_bytes=vmem_limit),
        cost_estimate=cost,
    )(state, action, w1s, w1a, b1, w2, b2, w3, b3, w4, b4)

    # lane-dense packed output -> (B, 1) q column (drop batch padding).
    return out.reshape(-1)[:B].reshape(B, 1)


def init_params(key, state_dim, action_dim, hidden_dim):
    """torch nn.Linear-style init; layer-1 weight stored pre-split (state/action)."""
    def linear(k, fan_in, fan_out):
        kw, kb = jax.random.split(k)
        bound = 1.0 / jnp.sqrt(jnp.float32(fan_in))
        w = jax.random.uniform(kw, (fan_in, fan_out), jnp.float32, -bound, bound)
        b = jax.random.uniform(kb, (1, fan_out), jnp.float32, -bound, bound)
        return w, b

    k1, k2, k3, k4 = jax.random.split(key, 4)
    w1, b1 = linear(k1, state_dim + action_dim, hidden_dim)
    w1s, w1a = w1[:state_dim], w1[state_dim:]
    w2, b2 = linear(k2, hidden_dim, hidden_dim)
    w3, b3 = linear(k3, hidden_dim, hidden_dim)
    w4t, b4 = linear(k4, hidden_dim, 1)
    w4 = w4t.T                                           # (1, H) row (torch layout)
    return (w1s, w1a, b1, w2, b2, w3, b3, w4, b4)


def critic_reference(state, action, params, compute_dtype=jnp.float32):
    """Pure-JAX reference. For float32 this is exactly the torch forward; for
    bf16 it mirrors the kernel's cast pattern (bf16 MXU operands, f32 accum)."""
    w1s, w1a, b1, w2, b2, w3, b3, w4, b4 = params
    c = lambda a: a.astype(compute_dtype)
    f32 = jnp.float32
    x = jnp.concatenate([c(state), c(action)], axis=-1)
    w1 = jnp.concatenate([c(w1s), c(w1a)], axis=0)
    h = jnp.maximum(jnp.dot(x, w1, preferred_element_type=f32) + b1, 0.0)
    h = jnp.maximum(jnp.dot(h.astype(compute_dtype), c(w2),
                            preferred_element_type=f32) + b2, 0.0)
    h = jnp.maximum(jnp.dot(h.astype(compute_dtype), c(w3),
                            preferred_element_type=f32) + b3, 0.0)
    return jnp.dot(h.astype(compute_dtype), c(w4).T,
                   preferred_element_type=f32) + b4.reshape(1, 1)


if __name__ == "__main__":
    B, STATE_DIM, ACTION_DIM, HIDDEN_DIM = 8, 12, 4, 32

    key = jax.random.PRNGKey(0)
    key, ks, ka, kp = jax.random.split(key, 4)
    state = jax.random.normal(ks, (B, STATE_DIM), jnp.float32)
    action = jax.random.normal(ka, (B, ACTION_DIM), jnp.float32)
    params = init_params(kp, STATE_DIM, ACTION_DIM, HIDDEN_DIM)

    # float32 path: bit-for-bit the torch module's math.
    q_f32 = jax.block_until_ready(
        critic_forward(state, action, params, compute_dtype=jnp.float32))
    ref_f32 = critic_reference(state, action, params, jnp.float32)
    assert q_f32.shape == (B, 1), q_f32.shape
    assert jnp.allclose(q_f32, ref_f32, atol=1e-5, rtol=1e-5), (q_f32, ref_f32)

    # bf16-operand path (default): dtype-aware tolerances.
    q_bf16 = jax.block_until_ready(critic_forward(state, action, params))
    ref_bf16 = critic_reference(state, action, params, jnp.bfloat16)
    assert q_bf16.shape == (B, 1), q_bf16.shape
    assert jnp.allclose(q_bf16, ref_bf16, atol=2e-3, rtol=2e-3), (q_bf16, ref_bf16)
    assert jnp.allclose(q_bf16, ref_f32, atol=1e-1, rtol=1e-1), (q_bf16, ref_f32)

    print("KERNEL_OK")
</pallas_src>

<mosaic_0001>
module attributes {stable_mosaic.version = 11 : i64} {
  func.func @critic_kernel(%arg0: i32, %arg1: memref<256x12xf32, #tpu.memory_space<vmem>>, %arg2: memref<256x4xf32, #tpu.memory_space<vmem>>, %arg3: memref<12x32xf32, #tpu.memory_space<vmem>>, %arg4: memref<4x32xf32, #tpu.memory_space<vmem>>, %arg5: memref<1x32xf32, #tpu.memory_space<vmem>>, %arg6: memref<32x32xf32, #tpu.memory_space<vmem>>, %arg7: memref<1x32xf32, #tpu.memory_space<vmem>>, %arg8: memref<32x32xf32, #tpu.memory_space<vmem>>, %arg9: memref<1x32xf32, #tpu.memory_space<vmem>>, %arg10: memref<1x32xf32, #tpu.memory_space<vmem>>, %arg11: memref<1x1xf32, #tpu.memory_space<smem>>, %arg12: memref<1x1x256xf32, #tpu.memory_space<vmem>>) attributes {dimension_semantics = [#tpu.dimension_semantics<parallel>], iteration_bounds = array<i64: 1>, scalar_prefetch = 0 : i64, scratch_operands = 0 : i64, tpu.core_type = #tpu.core_type<tc>, window_params = [{transform_indices = @transform_0, window_bounds = array<i64: 256, 12>}, {transform_indices = @transform_1, window_bounds = array<i64: 256, 4>}, {pipeline_mode = #tpu.pipeline_mode<synchronous>, transform_indices = @transform_2, window_bounds = array<i64: 12, 32>}, {pipeline_mode = #tpu.pipeline_mode<synchronous>, transform_indices = @transform_3, window_bounds = array<i64: 4, 32>}, {pipeline_mode = #tpu.pipeline_mode<synchronous>, transform_indices = @transform_4, window_bounds = array<i64: 1, 32>}, {pipeline_mode = #tpu.pipeline_mode<synchronous>, transform_indices = @transform_5, window_bounds = array<i64: 32, 32>}, {pipeline_mode = #tpu.pipeline_mode<synchronous>, transform_indices = @transform_6, window_bounds = array<i64: 1, 32>}, {pipeline_mode = #tpu.pipeline_mode<synchronous>, transform_indices = @transform_7, window_bounds = array<i64: 32, 32>}, {pipeline_mode = #tpu.pipeline_mode<synchronous>, transform_indices = @transform_8, window_bounds = array<i64: 1, 32>}, {pipeline_mode = #tpu.pipeline_mode<synchronous>, transform_indices = @transform_9, window_bounds = array<i64: 1, 32>}, {transform_indices = @transform_10, window_bounds = array<i64: 1, 1>}, {transform_indices = @transform_11, window_bounds = array<i64: 1, 1, 256>}]} {
    %c0 = arith.constant 0 : index
    %c0_0 = arith.constant 0 : index
    %0 = vector.load %arg1[%c0, %c0_0] : memref<256x12xf32, #tpu.memory_space<vmem>>, vector<256x12xf32>
    %c0_1 = arith.constant 0 : index
    %c0_2 = arith.constant 0 : index
    %1 = vector.load %arg3[%c0_1, %c0_2] : memref<12x32xf32, #tpu.memory_space<vmem>>, vector<12x32xf32>
    %cst = arith.constant dense<0.000000e+00> : vector<256x32xf32>
    %2 = tpu.matmul %0, %1, %cst {dimension_numbers = #tpu.dot_dimension_numbers<[1], [0], [0], [1], [0, 0, 1, 1], [], []>} : vector<256x12xf32>, vector<12x32xf32>, vector<256x32xf32> -> vector<256x32xf32>
    %c0_3 = arith.constant 0 : index
    %c0_4 = arith.constant 0 : index
    %3 = vector.load %arg2[%c0_3, %c0_4] : memref<256x4xf32, #tpu.memory_space<vmem>>, vector<256x4xf32>
    %c0_5 = arith.constant 0 : index
    %c0_6 = arith.constant 0 : index
    %4 = vector.load %arg4[%c0_5, %c0_6] : memref<4x32xf32, #tpu.memory_space<vmem>>, vector<4x32xf32>
    %cst_7 = arith.constant dense<0.000000e+00> : vector<256x32xf32>
    %5 = tpu.matmul %3, %4, %cst_7 {dimension_numbers = #tpu.dot_dimension_numbers<[1], [0], [0], [1], [0, 0, 1, 1], [], []>} : vector<256x4xf32>, vector<4x32xf32>, vector<256x32xf32> -> vector<256x32xf32>
    %6 = arith.addf %2, %5 : vector<256x32xf32>
    %c0_8 = arith.constant 0 : index
    %c0_9 = arith.constant 0 : index
    %7 = vector.load %arg5[%c0_8, %c0_9] : memref<1x32xf32, #tpu.memory_space<vmem>>, vector<1x32xf32>
    %8 = vector.broadcast %7 : vector<1x32xf32> to vector<256x32xf32>
    %9 = arith.addf %6, %8 : vector<256x32xf32>
    %cst_10 = arith.constant 0.000000e+00 : f32
    %10 = vector.broadcast %cst_10 : f32 to vector<256x32xf32>
    %11 = arith.maximumf %9, %10 : vector<256x32xf32>
    %c0_11 = arith.constant 0 : index
    %c0_12 = arith.constant 0 : index
    %12 = vector.load %arg6[%c0_11, %c0_12] : memref<32x32xf32, #tpu.memory_space<vmem>>, vector<32x32xf32>
    %cst_13 = arith.constant dense<0.000000e+00> : vector<256x32xf32>
    %13 = tpu.matmul %11, %12, %cst_13 {dimension_numbers = #tpu.dot_dimension_numbers<[1], [0], [0], [1], [0, 0, 1, 1], [], []>} : vector<256x32xf32>, vector<32x32xf32>, vector<256x32xf32> -> vector<256x32xf32>
    %c0_14 = arith.constant 0 : index
    %c0_15 = arith.constant 0 : index
    %14 = vector.load %arg7[%c0_14, %c0_15] : memref<1x32xf32, #tpu.memory_space<vmem>>, vector<1x32xf32>
    %15 = vector.broadcast %14 : vector<1x32xf32> to vector<256x32xf32>
    %16 = arith.addf %13, %15 : vector<256x32xf32>
    %cst_16 = arith.constant 0.000000e+00 : f32
    %17 = vector.broadcast %cst_16 : f32 to vector<256x32xf32>
    %18 = arith.maximumf %16, %17 : vector<256x32xf32>
    %c0_17 = arith.constant 0 : index
    %c0_18 = arith.constant 0 : index
    %19 = vector.load %arg8[%c0_17, %c0_18] : memref<32x32xf32, #tpu.memory_space<vmem>>, vector<32x32xf32>
    %cst_19 = arith.constant dense<0.000000e+00> : vector<256x32xf32>
    %20 = tpu.matmul %18, %19, %cst_19 {dimension_numbers = #tpu.dot_dimension_numbers<[1], [0], [0], [1], [0, 0, 1, 1], [], []>} : vector<256x32xf32>, vector<32x32xf32>, vector<256x32xf32> -> vector<256x32xf32>
    %c0_20 = arith.constant 0 : index
    %c0_21 = arith.constant 0 : index
    %21 = vector.load %arg9[%c0_20, %c0_21] : memref<1x32xf32, #tpu.memory_space<vmem>>, vector<1x32xf32>
    %22 = vector.broadcast %21 : vector<1x32xf32> to vector<256x32xf32>
    %23 = arith.addf %20, %22 : vector<256x32xf32>
    %cst_22 = arith.constant 0.000000e+00 : f32
    %24 = vector.broadcast %cst_22 : f32 to vector<256x32xf32>
    %25 = arith.maximumf %23, %24 : vector<256x32xf32>
    %c0_23 = arith.constant 0 : index
    %c0_24 = arith.constant 0 : index
    %26 = vector.load %arg10[%c0_23, %c0_24] : memref<1x32xf32, #tpu.memory_space<vmem>>, vector<1x32xf32>
    %cst_25 = arith.constant dense<0.000000e+00> : vector<1x256xf32>
    %27 = tpu.matmul %26, %25, %cst_25 {dimension_numbers = #tpu.dot_dimension_numbers<[1], [1], [0], [0], [0, 0, 1, 0], [], []>} : vector<1x32xf32>, vector<256x32xf32>, vector<1x256xf32> -> vector<1x256xf32>
    %c0_26 = arith.constant 0 : index
    %c0_27 = arith.constant 0 : index
    %28 = memref.load %arg11[%c0_26, %c0_27] : memref<1x1xf32, #tpu.memory_space<smem>>
    %29 = vector.broadcast %28 : f32 to vector<1x256xf32>
    %30 = arith.addf %27, %29 : vector<1x256xf32>
    %31 = vector.shape_cast %30 : vector<1x256xf32> to vector<1x1x256xf32>
    %c0_28 = arith.constant 0 : index
    %c0_29 = arith.constant 0 : index
    %c0_30 = arith.constant 0 : index
    %32 = vector.load %arg12[%c0_28, %c0_29, %c0_30] : memref<1x1x256xf32, #tpu.memory_space<vmem>>, vector<1x1x256xf32>
    tpu.vector_store %arg12[%c0_28, %c0_29, %c0_30], %31 {strides = array<i32>} : memref<1x1x256xf32, #tpu.memory_space<vmem>>, vector<1x1x256xf32>,
    return
  }
  func.func @transform_0(%arg0: i32) -> (i32, i32) {
    %c0_i32 = arith.constant 0 : i32
    %c0_i32_0 = arith.constant 0 : i32
    return %arg0, %c0_i32 : i32, i32
  }
  func.func @transform_1(%arg0: i32) -> (i32, i32) {
    %c0_i32 = arith.constant 0 : i32
    %c0_i32_0 = arith.constant 0 : i32
    return %arg0, %c0_i32 : i32, i32
  }
  func.func @transform_2(%arg0: i32) -> (i32, i32) {
    %c0_i32 = arith.constant 0 : i32
    %c0_i32_0 = arith.constant 0 : i32
    %c0_i32_1 = arith.constant 0 : i32
    return %c0_i32, %c0_i32_0 : i32, i32
  }
  func.func @transform_3(%arg0: i32) -> (i32, i32) {
    %c0_i32 = arith.constant 0 : i32
    %c0_i32_0 = arith.constant 0 : i32
    %c0_i32_1 = arith.constant 0 : i32
    return %c0_i32, %c0_i32_0 : i32, i32
  }
  func.func @transform_4(%arg0: i32) -> (i32, i32) {
    %c0_i32 = arith.constant 0 : i32
    %c0_i32_0 = arith.constant 0 : i32
    %c0_i32_1 = arith.constant 0 : i32
    return %c0_i32, %c0_i32_0 : i32, i32
  }
  func.func @transform_5(%arg0: i32) -> (i32, i32) {
    %c0_i32 = arith.constant 0 : i32
    %c0_i32_0 = arith.constant 0 : i32
    %c0_i32_1 = arith.constant 0 : i32
    return %c0_i32, %c0_i32_0 : i32, i32
  }
  func.func @transform_6(%arg0: i32) -> (i32, i32) {
    %c0_i32 = arith.constant 0 : i32
    %c0_i32_0 = arith.constant 0 : i32
    %c0_i32_1 = arith.constant 0 : i32
    return %c0_i32, %c0_i32_0 : i32, i32
  }
  func.func @transform_7(%arg0: i32) -> (i32, i32) {
    %c0_i32 = arith.constant 0 : i32
    %c0_i32_0 = arith.constant 0 : i32
    %c0_i32_1 = arith.constant 0 : i32
    return %c0_i32, %c0_i32_0 : i32, i32
  }
  func.func @transform_8(%arg0: i32) -> (i32, i32) {
    %c0_i32 = arith.constant 0 : i32
    %c0_i32_0 = arith.constant 0 : i32
    %c0_i32_1 = arith.constant 0 : i32
    return %c0_i32, %c0_i32_0 : i32, i32
  }
  func.func @transform_9(%arg0: i32) -> (i32, i32) {
    %c0_i32 = arith.constant 0 : i32
    %c0_i32_0 = arith.constant 0 : i32
    %c0_i32_1 = arith.constant 0 : i32
    return %c0_i32, %c0_i32_0 : i32, i32
  }
  func.func @transform_10(%arg0: i32) -> (i32, i32) {
    %c0_i32 = arith.constant 0 : i32
    %c0_i32_0 = arith.constant 0 : i32
    %c0_i32_1 = arith.constant 0 : i32
    return %c0_i32, %c0_i32_0 : i32, i32
  }
  func.func @transform_11(%arg0: i32) -> (i32, i32, i32) {
    %c0_i32 = arith.constant 0 : i32
    %c0_i32_0 = arith.constant 0 : i32
    %c0_i32_1 = arith.constant 0 : i32
    return %arg0, %c0_i32, %c0_i32_0 : i32, i32, i32
  }
}

</mosaic_0001>

<llo_original>
// kernel: tpu_custom_call.1
$region0: #{tpu_custom_call.1}
  #allocation0 [shape = 'u32[]', space=smem, size = 0x4, offset = 0x4, fixed_abs, tag = 'smem constant byte address 0x4 - core index']
  #allocation1 [shape = 'u32[144,128]{1,0:T(1,128)}', space=vmem, size = 0x12000, scoped, tag = 'internal scratch']
  #allocation2 [shape = 'f32[1,1]{1,0:T(1,128)S(6)}', space=smem, size = 0x200, scoped, tag = 'scoped memory for tpu_custom_call.1']
  %s0 = inlined_call_operand.vmem [shape: f32[256,12], index: 0, kind: input, shape index: {}]
  %s1 = inlined_call_operand.vmem [shape: f32[256,4], index: 1, kind: input, shape index: {}]
  %s2 = inlined_call_operand.vmem [shape: f32[12,32], index: 2, kind: input, shape index: {}]
  %s3 = inlined_call_operand.vmem [shape: f32[4,32], index: 3, kind: input, shape index: {}]
  %s4 = inlined_call_operand.vmem [shape: f32[1,32], index: 4, kind: input, shape index: {}]
  %s5 = inlined_call_operand.vmem [shape: f32[32,32], index: 5, kind: input, shape index: {}]
  %s6 = inlined_call_operand.vmem [shape: f32[1,32], index: 6, kind: input, shape index: {}]
  %s7 = inlined_call_operand.vmem [shape: f32[32,32], index: 7, kind: input, shape index: {}]
  %s8 = inlined_call_operand.vmem [shape: f32[1,32], index: 8, kind: input, shape index: {}]
  %s9 = inlined_call_operand.vmem [shape: f32[1,32], index: 9, kind: input, shape index: {}]
  %s10 = inlined_call_operand.<no memory space> [shape: f32[1,1], index: 10, kind: input, shape index: {}]
  %s11 = inlined_call_operand.hbm [shape: f32[1,1,256], index: 11, kind: output, shape index: {}]
  %s12 = sld [smem:[#allocation0]]
  $region54: #{tpu_custom_call.1} parent=0
    _
  %s14 = ssub.s32 1, %s12
  %s15 = scalar_select 0, %s14, %s12
  %16 = sst [smem:[#allocation2]] %s10
  $region1: #{tpu_custom_call.1} parent=0
    #allocation3 [shape = 'u8[1024]{0}', space=vmem, size = 0x400, scoped, tag = 'output window, operand 0, single buffered']
    #allocation4 [shape = 's32[1]{0}', space=sflag, size = 0x4, scoped, tag = 'scoped memory for tpu_custom_call.1']
    %17 = vsyncpa [#allocation4], 0
    // Predicated region
    $region2: #{tpu_custom_call.1} parent=1 // pred_check
      _
    $region3: #{tpu_custom_call.1} parent=1 // pred_check_branch
      %19 = sbr.rel (0) target = $region5
    $region4: #{tpu_custom_call.1} parent=1 // pred_region
      _
    $region5: #{tpu_custom_call.1} parent=1 // pred_fallthru
      _
    // Predicated region
    $region6: #{tpu_custom_call.1} parent=1 // pred_check
      _
    $region7: #{tpu_custom_call.1} parent=1 // pred_check_branch
      %21 = sbr.rel (0) target = $region9
    $region8: #{tpu_custom_call.1} parent=1 // pred_region
      _
    $region9: #{tpu_custom_call.1} parent=1 // pred_fallthru
      _
    // Predicated region
    $region10: #{tpu_custom_call.1} parent=1 // pred_check
      _
    $region11: #{tpu_custom_call.1} parent=1 // pred_check_branch
      %23 = sbr.rel (0) target = $region13
    $region12: #{tpu_custom_call.1} parent=1 // pred_region
      _
    $region13: #{tpu_custom_call.1} parent=1 // pred_fallthru
      _
    // Predicated region
    $region14: #{tpu_custom_call.1} parent=1 // pred_check
      _
    $region15: #{tpu_custom_call.1} parent=1 // pred_check_branch
      %25 = sbr.rel (0) target = $region17
    $region16: #{tpu_custom_call.1} parent=1 // pred_region
      _
    $region17: #{tpu_custom_call.1} parent=1 // pred_fallthru
      _
    // Predicated region
    $region18: #{tpu_custom_call.1} parent=1 // pred_check
      _
    $region19: #{tpu_custom_call.1} parent=1 // pred_check_branch
      %27 = sbr.rel (0) target = $region21
    $region20: #{tpu_custom_call.1} parent=1 // pred_region
      _
    $region21: #{tpu_custom_call.1} parent=1 // pred_fallthru
      _
    // Predicated region
    $region22: #{tpu_custom_call.1} parent=1 // pred_check
      _
    $region23: #{tpu_custom_call.1} parent=1 // pred_check_branch
      %29 = sbr.rel (0) target = $region25
    $region24: #{tpu_custom_call.1} parent=1 // pred_region
      _
    $region25: #{tpu_custom_call.1} parent=1 // pred_fallthru
      _
    // Predicated region
    $region26: #{tpu_custom_call.1} parent=1 // pred_check
      _
    $region27: #{tpu_custom_call.1} parent=1 // pred_check_branch
      %31 = sbr.rel (0) target = $region29
    $region28: #{tpu_custom_call.1} parent=1 // pred_region
      _
    $region29: #{tpu_custom_call.1} parent=1 // pred_fallthru
      _
    // Predicated region
    $region30: #{tpu_custom_call.1} parent=1 // pred_check
      _
    $region31: #{tpu_custom_call.1} parent=1 // pred_check_branch
      %33 = sbr.rel (0) target = $region33
    $region32: #{tpu_custom_call.1} parent=1 // pred_region
      _
    $region33: #{tpu_custom_call.1} parent=1 // pred_fallthru
      _
    // Predicated region
    $region34: #{tpu_custom_call.1} parent=1 // pred_check
      _
    $region35: #{tpu_custom_call.1} parent=1 // pred_check_branch
      %35 = sbr.rel (0) target = $region37
    $region36: #{tpu_custom_call.1} parent=1 // pred_region
      _
    $region37: #{tpu_custom_call.1} parent=1 // pred_fallthru
      _
    // Predicated region
    $region38: #{tpu_custom_call.1} parent=1 // pred_check
      _
    $region39: #{tpu_custom_call.1} parent=1 // pred_check_branch
      %37 = sbr.rel (0) target = $region41
    $region40: #{tpu_custom_call.1} parent=1 // pred_region
      _
    $region41: #{tpu_custom_call.1} parent=1 // pred_fallthru
      _
    // Predicated region
    $region42: #{tpu_custom_call.1} parent=1 // pred_check
      _
    $region43: #{tpu_custom_call.1} parent=1 // pred_check_branch
      %39 = sbr.rel (0) target = $region45
    $region44: #{tpu_custom_call.1} parent=1 // pred_region
      _
    $region45: #{tpu_custom_call.1} parent=1 // pred_fallthru
      _
    %v40 = vld [vmem:[%s0] sm:$0xff]
    %v41 = vld [vmem:[%s0 + $0x8] sm:$0xff]
    %v42 = vld [vmem:[%s0 + $0x10] sm:$0xff]
    %v43 = vld [vmem:[%s0 + $0x18] sm:$0xff]
    %v44 = vld [vmem:[%s0 + $0x20] sm:$0xff]
    %v45 = vld [vmem:[%s0 + $0x28] sm:$0xff]
    %v46 = vld [vmem:[%s0 + $0x30] sm:$0xff]
    %v47 = vld [vmem:[%s0 + $0x38] sm:$0xff]
    %v48 = vld [vmem:[%s0 + $0x40] sm:$0xff]
    %v49 = vld [vmem:[%s0 + $0x48] sm:$0xff]
    %v50 = vld [vmem:[%s0 + $0x50] sm:$0xff]
    %v51 = vld [vmem:[%s0 + $0x58] sm:$0xff]
    %v52 = vld [vmem:[%s0 + $0x60] sm:$0xff]
    %v53 = vld [vmem:[%s0 + $0x68] sm:$0xff]
    %v54 = vld [vmem:[%s0 + $0x70] sm:$0xff]
    %v55 = vld [vmem:[%s0 + $0x78] sm:$0xff]
    %v56 = vld [vmem:[%s0 + $0x80] sm:$0xff]
    %v57 = vld [vmem:[%s0 + $0x88] sm:$0xff]
    %v58 = vld [vmem:[%s0 + $0x90] sm:$0xff]
    %v59 = vld [vmem:[%s0 + $0x98] sm:$0xff]
    %v60 = vld [vmem:[%s0 + $0xa0] sm:$0xff]
    %v61 = vld [vmem:[%s0 + $0xa8] sm:$0xff]
    %v62 = vld [vmem:[%s0 + $0xb0] sm:$0xff]
    %v63 = vld [vmem:[%s0 + $0xb8] sm:$0xff]
    %v64 = vld [vmem:[%s0 + $0xc0] sm:$0xff]
    %v65 = vld [vmem:[%s0 + $0xc8] sm:$0xff]
    %v66 = vld [vmem:[%s0 + $0xd0] sm:$0xff]
    %v67 = vld [vmem:[%s0 + $0xd8] sm:$0xff]
    %v68 = vld [vmem:[%s0 + $0xe0] sm:$0xff]
    %v69 = vld [vmem:[%s0 + $0xe8] sm:$0xff]
    %v70 = vld [vmem:[%s0 + $0xf0] sm:$0xff]
    %v71 = vld [vmem:[%s0 + $0xf8] sm:$0xff]
    %v72 = vld [vmem:[%s2] sm:$0xff]
    %v73 = vld [vmem:[%s2 + $0x8] sm:$0xf]
    %v74 = vld [vmem:[%s1] sm:$0xff]
    %v75 = vld [vmem:[%s1 + $0x8] sm:$0xff]
    %v76 = vld [vmem:[%s1 + $0x10] sm:$0xff]
    %v77 = vld [vmem:[%s1 + $0x18] sm:$0xff]
    %v78 = vld [vmem:[%s1 + $0x20] sm:$0xff]
    %v79 = vld [vmem:[%s1 + $0x28] sm:$0xff]
    %v80 = vld [vmem:[%s1 + $0x30] sm:$0xff]
    %v81 = vld [vmem:[%s1 + $0x38] sm:$0xff]
    %v82 = vld [vmem:[%s1 + $0x40] sm:$0xff]
    %v83 = vld [vmem:[%s1 + $0x48] sm:$0xff]
    %v84 = vld [vmem:[%s1 + $0x50] sm:$0xff]
    %v85 = vld [vmem:[%s1 + $0x58] sm:$0xff]
    %v86 = vld [vmem:[%s1 + $0x60] sm:$0xff]
    %v87 = vld [vmem:[%s1 + $0x68] sm:$0xff]
    %v88 = vld [vmem:[%s1 + $0x70] sm:$0xff]
    %v89 = vld [vmem:[%s1 + $0x78] sm:$0xff]
    %v90 = vld [vmem:[%s1 + $0x80] sm:$0xff]
    %v91 = vld [vmem:[%s1 + $0x88] sm:$0xff]
    %v92 = vld [vmem:[%s1 + $0x90] sm:$0xff]
    %v93 = vld [vmem:[%s1 + $0x98] sm:$0xff]
    %v94 = vld [vmem:[%s1 + $0xa0] sm:$0xff]
    %v95 = vld [vmem:[%s1 + $0xa8] sm:$0xff]
    %v96 = vld [vmem:[%s1 + $0xb0] sm:$0xff]
    %v97 = vld [vmem:[%s1 + $0xb8] sm:$0xff]
    %v98 = vld [vmem:[%s1 + $0xc0] sm:$0xff]
    %v99 = vld [vmem:[%s1 + $0xc8] sm:$0xff]
    %v100 = vld [vmem:[%s1 + $0xd0] sm:$0xff]
    %v101 = vld [vmem:[%s1 + $0xd8] sm:$0xff]
    %v102 = vld [vmem:[%s1 + $0xe0] sm:$0xff]
    %v103 = vld [vmem:[%s1 + $0xe8] sm:$0xff]
    %v104 = vld [vmem:[%s1 + $0xf0] sm:$0xff]
    %v105 = vld [vmem:[%s1 + $0xf8] sm:$0xff]
    %v106 = vld [vmem:[%s3] sm:$0xf]
    %vm107 = vcmask 31744
    %v109 = vsel %vm107, %v74, 0
    %v112 = vsel %vm107, %v75, 0
    %v115 = vsel %vm107, %v76, 0
    %v118 = vsel %vm107, %v77, 0
    %v121 = vsel %vm107, %v78, 0
    %v124 = vsel %vm107, %v79, 0
    %v127 = vsel %vm107, %v80, 0
    %v130 = vsel %vm107, %v81, 0
    %v133 = vsel %vm107, %v82, 0
    %v136 = vsel %vm107, %v83, 0
    %v139 = vsel %vm107, %v84, 0
    %v142 = vsel %vm107, %v85, 0
    %v145 = vsel %vm107, %v86, 0
    %v148 = vsel %vm107, %v87, 0
    %v151 = vsel %vm107, %v88, 0
    %v154 = vsel %vm107, %v89, 0
    %v157 = vsel %vm107, %v90, 0
    %v160 = vsel %vm107, %v91, 0
    %v163 = vsel %vm107, %v92, 0
    %v166 = vsel %vm107, %v93, 0
    %v169 = vsel %vm107, %v94, 0
    %v172 = vsel %vm107, %v95, 0
    %v175 = vsel %vm107, %v96, 0
    %v178 = vsel %vm107, %v97, 0
    %v181 = vsel %vm107, %v98, 0
    %v184 = vsel %vm107, %v99, 0
    %v187 = vsel %vm107, %v100, 0
    %v190 = vsel %vm107, %v101, 0
    %v193 = vsel %vm107, %v102, 0
    %v196 = vsel %vm107, %v103, 0
    %v199 = vsel %vm107, %v104, 0
    %v202 = vsel %vm107, %v105, 0
    %vm204 = vcmask 1043456
    %v206 = vsel %vm204, %v106, 0
    %208 = vmatprep.subr.mxu0 0.0
    %209 = vmatpush1.msra.mxu0 0.0
    %210 = vmatprep.subr.mxu0 0.0
    %211 = vmatpush1.msra.mxu0 0.0
    %212 = vmatprep.subr.mxu0 0.0
    %213 = vmatpush1.msra.mxu0 0.0
    %214 = vmatprep.subr.mxu0 0.0
    %215 = vmatpush1.msra.mxu0 0.0
    %216 = vmatprep.subr.mxu0 0.0
    %217 = vmatpush1.msra.mxu0 0.0
    %218 = vmatprep.subr.mxu0 0.0
    %219 = vmatpush1.msra.mxu0 0.0
    %220 = vmatprep.subr.mxu0 0.0
    %221 = vmatpush1.msra.mxu0 0.0
    %222 = vmatprep.subr.mxu0 0.0
    %223 = vmatpush1.msra.mxu0 0.0
    %224 = vmatprep.subr.mxu0 0.0
    %225 = vmatpush1.msra.mxu0 0.0
    %226 = vmatprep.subr.mxu0 0.0
    %227 = vmatpush1.msra.mxu0 0.0
    %228 = vmatprep.subr.mxu0 0.0
    %229 = vmatpush1.msra.mxu0 0.0
    %230 = vmatprep.subr.mxu0 0.0
    %231 = vmatpush1.msra.mxu0 0.0
    %232 = vmatprep.subr.mxu0 0.0
    %233 = vmatpush1.msra.mxu0 0.0
    %234 = vmatprep.subr.mxu0 0.0
    %235 = vmatpush1.msra.mxu0 0.0
    %236 = vmatprep.subr.mxu0 0.0
    %237 = vmatpush1.msra.mxu0 0.0
    %238 = vmatprep.subr.mxu0 0.0
    %239 = vmatpush1.msra.mxu0 %v206
    %240 = vmatprep.subr.mxu0 0.0
    %241 = vmatpush2.msra.mxu0 0.0
    %242 = vmatprep.subr.mxu0 0.0
    %243 = vmatpush2.msra.mxu0 0.0
    %244 = vmatprep.subr.mxu0 0.0
    %245 = vmatpush2.msra.mxu0 0.0
    %246 = vmatprep.subr.mxu0 0.0
    %247 = vmatpush2.msra.mxu0 0.0
    %248 = vmatprep.subr.mxu0 0.0
    %249 = vmatpush2.msra.mxu0 0.0
    %250 = vmatprep.subr.mxu0 0.0
    %251 = vmatpush2.msra.mxu0 0.0
    %252 = vmatprep.subr.mxu0 0.0
    %253 = vmatpush2.msra.mxu0 0.0
    %254 = vmatprep.subr.mxu0 0.0
    %255 = vmatpush2.msra.mxu0 0.0
    %256 = vmatprep.subr.mxu0 0.0
    %257 = vmatpush2.msra.mxu0 0.0
    %258 = vmatprep.subr.mxu0 0.0
    %259 = vmatpush2.msra.mxu0 0.0
    %260 = vmatprep.subr.mxu0 0.0
    %261 = vmatpush2.msra.mxu0 0.0
    %262 = vmatprep.subr.mxu0 0.0
    %263 = vmatpush2.msra.mxu0 0.0
    %264 = vmatprep.subr.mxu0 0.0
    %265 = vmatpush2.msra.mxu0 0.0
    %266 = vmatprep.subr.mxu0 0.0
    %267 = vmatpush2.msra.mxu0 0.0
    %268 = vmatprep.subr.mxu0 0.0
    %269 = vmatpush2.msra.mxu0 0.0
    %270 = vmatprep.subr.mxu0 0.0
    %271 = vmatpush2.msra.mxu0 0.0
    %272 = vmatprep.mubr.f32.mxu0 0.0
    %273 = vmatmul.mubr.f32.gmra.mxu0 %v109
    %v274 = vpop.f32.mrf.mxu0
    %v275 = vadd.f32 0.0, %v274
    %v276 = vpop.f32.mrf.mxu0
    %277 = vmatprep.mubr.f32.mxu0 0.0
    %278 = vmatmul.mubr.f32.gmra.mxu0 %v112
    %v279 = vpop.f32.mrf.mxu0
    %v280 = vadd.f32 0.0, %v279
    %v281 = vpop.f32.mrf.mxu0
    %282 = vmatprep.mubr.f32.mxu0 0.0
    %283 = vmatmul.mubr.f32.gmra.mxu0 %v115
    %v284 = vpop.f32.mrf.mxu0
    %v285 = vadd.f32 0.0, %v284
    %v286 = vpop.f32.mrf.mxu0
    %287 = vmatprep.mubr.f32.mxu0 0.0
    %288 = vmatmul.mubr.f32.gmra.mxu0 %v118
    %v289 = vpop.f32.mrf.mxu0
    %v290 = vadd.f32 0.0, %v289
    %v291 = vpop.f32.mrf.mxu0
    %292 = vmatprep.mubr.f32.mxu0 0.0
    %293 = vmatmul.mubr.f32.gmra.mxu0 %v121
    %v294 = vpop.f32.mrf.mxu0
    %v295 = vadd.f32 0.0, %v294
    %v296 = vpop.f32.mrf.mxu0
    %297 = vmatprep.mubr.f32.mxu0 0.0
    %298 = vmatmul.mubr.f32.gmra.mxu0 %v124
    %v299 = vpop.f32.mrf.mxu0
    %v300 = vadd.f32 0.0, %v299
    %v301 = vpop.f32.mrf.mxu0
    %302 = vmatprep.mubr.f32.mxu0 0.0
    %303 = vmatmul.mubr.f32.gmra.mxu0 %v127
    %v304 = vpop.f32.mrf.mxu0
    %v305 = vadd.f32 0.0, %v304
    %v306 = vpop.f32.mrf.mxu0
    %307 = vmatprep.mubr.f32.mxu0 0.0
    %308 = vmatmul.mubr.f32.gmra.mxu0 %v130
    %v309 = vpop.f32.mrf.mxu0
    %v310 = vadd.f32 0.0, %v309
    %v311 = vpop.f32.mrf.mxu0
    %312 = vmatprep.mubr.f32.mxu0 0.0
    %313 = vmatmul.mubr.f32.gmra.mxu0 %v133
    %v314 = vpop.f32.mrf.mxu0
    %v315 = vadd.f32 0.0, %v314
    %v316 = vpop.f32.mrf.mxu0
    %317 = vmatprep.mubr.f32.mxu0 0.0
    %318 = vmatmul.mubr.f32.gmra.mxu0 %v136
    %v319 = vpop.f32.mrf.mxu0
    %v320 = vadd.f32 0.0, %v319
    %v321 = vpop.f32.mrf.mxu0
    %322 = vmatprep.mubr.f32.mxu0 0.0
    %323 = vmatmul.mubr.f32.gmra.mxu0 %v139
    %v324 = vpop.f32.mrf.mxu0
    %v325 = vadd.f32 0.0, %v324
    %v326 = vpop.f32.mrf.mxu0
    %327 = vmatprep.mubr.f32.mxu0 0.0
    %328 = vmatmul.mubr.f32.gmra.mxu0 %v142
    %v329 = vpop.f32.mrf.mxu0
    %v330 = vadd.f32 0.0, %v329
    %v331 = vpop.f32.mrf.mxu0
    %332 = vmatprep.mubr.f32.mxu0 0.0
    %333 = vmatmul.mubr.f32.gmra.mxu0 %v145
    %v334 = vpop.f32.mrf.mxu0
    %v335 = vadd.f32 0.0, %v334
    %v336 = vpop.f32.mrf.mxu0
    %337 = vmatprep.mubr.f32.mxu0 0.0
    %338 = vmatmul.mubr.f32.gmra.mxu0 %v148
    %v339 = vpop.f32.mrf.mxu0
    %v340 = vadd.f32 0.0, %v339
    %v341 = vpop.f32.mrf.mxu0
    %342 = vmatprep.mubr.f32.mxu0 0.0
    %343 = vmatmul.mubr.f32.gmra.mxu0 %v151
    %v344 = vpop.f32.mrf.mxu0
    %v345 = vadd.f32 0.0, %v344
    %v346 = vpop.f32.mrf.mxu0
    %347 = vmatprep.mubr.f32.mxu0 0.0
    %348 = vmatmul.mubr.f32.gmra.mxu0 %v154
    %v349 = vpop.f32.mrf.mxu0
    %v350 = vadd.f32 0.0, %v349
    %v351 = vpop.f32.mrf.mxu0
    %352 = vmatprep.mubr.f32.mxu0 0.0
    %353 = vmatmul.mubr.f32.gmra.mxu0 %v157
    %v354 = vpop.f32.mrf.mxu0
    %v355 = vadd.f32 0.0, %v354
    %v356 = vpop.f32.mrf.mxu0
    %357 = vmatprep.mubr.f32.mxu0 0.0
    %358 = vmatmul.mubr.f32.gmra.mxu0 %v160
    %v359 = vpop.f32.mrf.mxu0
    %v360 = vadd.f32 0.0, %v359
    %v361 = vpop.f32.mrf.mxu0
    %362 = vmatprep.mubr.f32.mxu0 0.0
    %363 = vmatmul.mubr.f32.gmra.mxu0 %v163
    %v364 = vpop.f32.mrf.mxu0
    %v365 = vadd.f32 0.0, %v364
    %v366 = vpop.f32.mrf.mxu0
    %367 = vmatprep.mubr.f32.mxu0 0.0
    %368 = vmatmul.mubr.f32.gmra.mxu0 %v166
    %v369 = vpop.f32.mrf.mxu0
    %v370 = vadd.f32 0.0, %v369
    %v371 = vpop.f32.mrf.mxu0
    %372 = vmatprep.mubr.f32.mxu0 0.0
    %373 = vmatmul.mubr.f32.gmra.mxu0 %v169
    %v374 = vpop.f32.mrf.mxu0
    %v375 = vadd.f32 0.0, %v374
    %v376 = vpop.f32.mrf.mxu0
    %377 = vmatprep.mubr.f32.mxu0 0.0
    %378 = vmatmul.mubr.f32.gmra.mxu0 %v172
    %v379 = vpop.f32.mrf.mxu0
    %v380 = vadd.f32 0.0, %v379
    %v381 = vpop.f32.mrf.mxu0
    %382 = vmatprep.mubr.f32.mxu0 0.0
    %383 = vmatmul.mubr.f32.gmra.mxu0 %v175
    %v384 = vpop.f32.mrf.mxu0
    %v385 = vadd.f32 0.0, %v384
    %v386 = vpop.f32.mrf.mxu0
    %387 = vmatprep.mubr.f32.mxu0 0.0
    %388 = vmatmul.mubr.f32.gmra.mxu0 %v178
    %v389 = vpop.f32.mrf.mxu0
    %v390 = vadd.f32 0.0, %v389
    %v391 = vpop.f32.mrf.mxu0
    %392 = vmatprep.mubr.f32.mxu0 0.0
    %393 = vmatmul.mubr.f32.gmra.mxu0 %v181
    %v394 = vpop.f32.mrf.mxu0
    %v395 = vadd.f32 0.0, %v394
    %v396 = vpop.f32.mrf.mxu0
    %397 = vmatprep.mubr.f32.mxu0 0.0
    %398 = vmatmul.mubr.f32.gmra.mxu0 %v184
    %v399 = vpop.f32.mrf.mxu0
    %v400 = vadd.f32 0.0, %v399
    %v401 = vpop.f32.mrf.mxu0
    %402 = vmatprep.mubr.f32.mxu0 0.0
    %403 = vmatmul.mubr.f32.gmra.mxu0 %v187
    %v404 = vpop.f32.mrf.mxu0
    %v405 = vadd.f32 0.0, %v404
    %v406 = vpop.f32.mrf.mxu0
    %407 = vmatprep.mubr.f32.mxu0 0.0
    %408 = vmatmul.mubr.f32.gmra.mxu0 %v190
    %v409 = vpop.f32.mrf.mxu0
    %v410 = vadd.f32 0.0, %v409
    %v411 = vpop.f32.mrf.mxu0
    %412 = vmatprep.mubr.f32.mxu0 0.0
    %413 = vmatmul.mubr.f32.gmra.mxu0 %v193
    %v414 = vpop.f32.mrf.mxu0
    %v415 = vadd.f32 0.0, %v414
    %v416 = vpop.f32.mrf.mxu0
    %417 = vmatprep.mubr.f32.mxu0 0.0
    %418 = vmatmul.mubr.f32.gmra.mxu0 %v196
    %v419 = vpop.f32.mrf.mxu0
    %v420 = vadd.f32 0.0, %v419
    %v421 = vpop.f32.mrf.mxu0
    %422 = vmatprep.mubr.f32.mxu0 0.0
    %423 = vmatmul.mubr.f32.gmra.mxu0 %v199
    %v424 = vpop.f32.mrf.mxu0
    %v425 = vadd.f32 0.0, %v424
    %v426 = vpop.f32.mrf.mxu0
    %427 = vmatprep.mubr.f32.mxu0 0.0
    %428 = vmatmul.mubr.f32.gmra.mxu0 %v202
    %v429 = vpop.f32.mrf.mxu0
    %v430 = vadd.f32 0.0, %v429
    %v431 = vpop.f32.mrf.mxu0
    %432 = vdwg.mxu0
    %vm433 = vcmask 97280
    %v435 = vsel %vm433, %v40, 0
    %v438 = vsel %vm433, %v41, 0
    %v441 = vsel %vm433, %v42, 0
    %v444 = vsel %vm433, %v43, 0
    %v447 = vsel %vm433, %v44, 0
    %v450 = vsel %vm433, %v45, 0
    %v453 = vsel %vm433, %v46, 0
    %v456 = vsel %vm433, %v47, 0
    %v459 = vsel %vm433, %v48, 0
    %v462 = vsel %vm433, %v49, 0
    %v465 = vsel %vm433, %v50, 0
    %v468 = vsel %vm433, %v51, 0
    %v471 = vsel %vm433, %v52, 0
    %v474 = vsel %vm433, %v53, 0
    %v477 = vsel %vm433, %v54, 0
    %v480 = vsel %vm433, %v55, 0
    %v483 = vsel %vm433, %v56, 0
    %v486 = vsel %vm433, %v57, 0
    %v489 = vsel %vm433, %v58, 0
    %v492 = vsel %vm433, %v59, 0
    %v495 = vsel %vm433, %v60, 0
    %v498 = vsel %vm433, %v61, 0
    %v501 = vsel %vm433, %v62, 0
    %v504 = vsel %vm433, %v63, 0
    %v507 = vsel %vm433, %v64, 0
    %v510 = vsel %vm433, %v65, 0
    %v513 = vsel %vm433, %v66, 0
    %v516 = vsel %vm433, %v67, 0
    %v519 = vsel %vm433, %v68, 0
    %v522 = vsel %vm433, %v69, 0
    %v525 = vsel %vm433, %v70, 0
    %v528 = vsel %vm433, %v71, 0
    %v531 = vsel %vm204, %v73, 0
    %533 = vmatprep.subr.mxu0 0.0
    %534 = vmatpush1.msra.mxu0 0.0
    %535 = vmatprep.subr.mxu0 0.0
    %536 = vmatpush1.msra.mxu0 0.0
    %537 = vmatprep.subr.mxu0 0.0
    %538 = vmatpush1.msra.mxu0 0.0
    %539 = vmatprep.subr.mxu0 0.0
    %540 = vmatpush1.msra.mxu0 0.0
    %541 = vmatprep.subr.mxu0 0.0
    %542 = vmatpush1.msra.mxu0 0.0
    %543 = vmatprep.subr.mxu0 0.0
    %544 = vmatpush1.msra.mxu0 0.0
    %545 = vmatprep.subr.mxu0 0.0
    %546 = vmatpush1.msra.mxu0 0.0
    %547 = vmatprep.subr.mxu0 0.0
    %548 = vmatpush1.msra.mxu0 0.0
    %549 = vmatprep.subr.mxu0 0.0
    %550 = vmatpush1.msra.mxu0 0.0
    %551 = vmatprep.subr.mxu0 0.0
    %552 = vmatpush1.msra.mxu0 0.0
    %553 = vmatprep.subr.mxu0 0.0
    %554 = vmatpush1.msra.mxu0 0.0
    %555 = vmatprep.subr.mxu0 0.0
    %556 = vmatpush1.msra.mxu0 0.0
    %557 = vmatprep.subr.mxu0 0.0
    %558 = vmatpush1.msra.mxu0 0.0
    %559 = vmatprep.subr.mxu0 0.0
    %560 = vmatpush1.msra.mxu0 0.0
    %561 = vmatprep.subr.mxu0 0.0
    %562 = vmatpush1.msra.mxu0 %v531
    %563 = vmatprep.subr.mxu0 0.0
    %564 = vmatpush1.msra.mxu0 %v72
    %565 = vmatprep.subr.mxu0 0.0
    %566 = vmatpush2.msra.mxu0 0.0
    %567 = vmatprep.subr.mxu0 0.0
    %568 = vmatpush2.msra.mxu0 0.0
    %569 = vmatprep.subr.mxu0 0.0
    %570 = vmatpush2.msra.mxu0 0.0
    %571 = vmatprep.subr.mxu0 0.0
    %572 = vmatpush2.msra.mxu0 0.0
    %573 = vmatprep.subr.mxu0 0.0
    %574 = vmatpush2.msra.mxu0 0.0
    %575 = vmatprep.subr.mxu0 0.0
    %576 = vmatpush2.msra.mxu0 0.0
    %577 = vmatprep.subr.mxu0 0.0
    %578 = vmatpush2.msra.mxu0 0.0
    %579 = vmatprep.subr.mxu0 0.0
    %580 = vmatpush2.msra.mxu0 0.0
    %581 = vmatprep.subr.mxu0 0.0
    %582 = vmatpush2.msra.mxu0 0.0
    %583 = vmatprep.subr.mxu0 0.0
    %584 = vmatpush2.msra.mxu0 0.0
    %585 = vmatprep.subr.mxu0 0.0
    %586 = vmatpush2.msra.mxu0 0.0
    %587 = vmatprep.subr.mxu0 0.0
    %588 = vmatpush2.msra.mxu0 0.0
    %589 = vmatprep.subr.mxu0 0.0
    %590 = vmatpush2.msra.mxu0 0.0
    %591 = vmatprep.subr.mxu0 0.0
    %592 = vmatpush2.msra.mxu0 0.0
    %593 = vmatprep.subr.mxu0 0.0
    %594 = vmatpush2.msra.mxu0 0.0
    %595 = vmatprep.subr.mxu0 0.0
    %596 = vmatpush2.msra.mxu0 0.0
    %597 = vmatprep.mubr.f32.mxu0 0.0
    %598 = vmatmul.mubr.f32.gmra.mxu0 %v435
    %v599 = vpop.f32.mrf.mxu0
    %v600 = vadd.f32 %v275, %v599
    %v601 = vpop.f32.mrf.mxu0
    %602 = vmatprep.mubr.f32.mxu0 0.0
    %603 = vmatmul.mubr.f32.gmra.mxu0 %v438
    %v604 = vpop.f32.mrf.mxu0
    %v605 = vadd.f32 %v280, %v604
    %v606 = vpop.f32.mrf.mxu0
    %607 = vmatprep.mubr.f32.mxu0 0.0
    %608 = vmatmul.mubr.f32.gmra.mxu0 %v441
    %v609 = vpop.f32.mrf.mxu0
    %v610 = vadd.f32 %v285, %v609
    %v611 = vpop.f32.mrf.mxu0
    %612 = vmatprep.mubr.f32.mxu0 0.0
    %613 = vmatmul.mubr.f32.gmra.mxu0 %v444
    %v614 = vpop.f32.mrf.mxu0
    %v615 = vadd.f32 %v290, %v614
    %v616 = vpop.f32.mrf.mxu0
    %617 = vmatprep.mubr.f32.mxu0 0.0
    %618 = vmatmul.mubr.f32.gmra.mxu0 %v447
    %v619 = vpop.f32.mrf.mxu0
    %v620 = vadd.f32 %v295, %v619
    %v621 = vpop.f32.mrf.mxu0
    %622 = vmatprep.mubr.f32.mxu0 0.0
    %623 = vmatmul.mubr.f32.gmra.mxu0 %v450
    %v624 = vpop.f32.mrf.mxu0
    %v625 = vadd.f32 %v300, %v624
    %v626 = vpop.f32.mrf.mxu0
    %627 = vmatprep.mubr.f32.mxu0 0.0
    %628 = vmatmul.mubr.f32.gmra.mxu0 %v453
    %v629 = vpop.f32.mrf.mxu0
    %v630 = vadd.f32 %v305, %v629
    %v631 = vpop.f32.mrf.mxu0
    %632 = vmatprep.mubr.f32.mxu0 0.0
    %633 = vmatmul.mubr.f32.gmra.mxu0 %v456
    %v634 = vpop.f32.mrf.mxu0
    %v635 = vadd.f32 %v310, %v634
    %v636 = vpop.f32.mrf.mxu0
    %637 = vmatprep.mubr.f32.mxu0 0.0
    %638 = vmatmul.mubr.f32.gmra.mxu0 %v459
    %v639 = vpop.f32.mrf.mxu0
    %v640 = vadd.f32 %v315, %v639
    %v641 = vpop.f32.mrf.mxu0
    %642 = vmatprep.mubr.f32.mxu0 0.0
    %643 = vmatmul.mubr.f32.gmra.mxu0 %v462
    %v644 = vpop.f32.mrf.mxu0
    %v645 = vadd.f32 %v320, %v644
    %v646 = vpop.f32.mrf.mxu0
    %647 = vmatprep.mubr.f32.mxu0 0.0
    %648 = vmatmul.mubr.f32.gmra.mxu0 %v465
    %v649 = vpop.f32.mrf.mxu0
    %v650 = vadd.f32 %v325, %v649
    %v651 = vpop.f32.mrf.mxu0
    %652 = vmatprep.mubr.f32.mxu0 0.0
    %653 = vmatmul.mubr.f32.gmra.mxu0 %v468
    %v654 = vpop.f32.mrf.mxu0
    %v655 = vadd.f32 %v330, %v654
    %v656 = vpop.f32.mrf.mxu0
    %657 = vmatprep.mubr.f32.mxu0 0.0
    %658 = vmatmul.mubr.f32.gmra.mxu0 %v471
    %v659 = vpop.f32.mrf.mxu0
    %v660 = vadd.f32 %v335, %v659
    %v661 = vpop.f32.mrf.mxu0
    %662 = vmatprep.mubr.f32.mxu0 0.0
    %663 = vmatmul.mubr.f32.gmra.mxu0 %v474
    %v664 = vpop.f32.mrf.mxu0
    %v665 = vadd.f32 %v340, %v664
    %v666 = vpop.f32.mrf.mxu0
    %667 = vmatprep.mubr.f32.mxu0 0.0
    %668 = vmatmul.mubr.f32.gmra.mxu0 %v477
    %v669 = vpop.f32.mrf.mxu0
    %v670 = vadd.f32 %v345, %v669
    %v671 = vpop.f32.mrf.mxu0
    %672 = vmatprep.mubr.f32.mxu0 0.0
    %673 = vmatmul.mubr.f32.gmra.mxu0 %v480
    %v674 = vpop.f32.mrf.mxu0
    %v675 = vadd.f32 %v350, %v674
    %v676 = vpop.f32.mrf.mxu0
    %677 = vmatprep.mubr.f32.mxu0 0.0
    %678 = vmatmul.mubr.f32.gmra.mxu0 %v483
    %v679 = vpop.f32.mrf.mxu0
    %v680 = vadd.f32 %v355, %v679
    %v681 = vpop.f32.mrf.mxu0
    %682 = vmatprep.mubr.f32.mxu0 0.0
    %683 = vmatmul.mubr.f32.gmra.mxu0 %v486
    %v684 = vpop.f32.mrf.mxu0
    %v685 = vadd.f32 %v360, %v684
    %v686 = vpop.f32.mrf.mxu0
    %687 = vmatprep.mubr.f32.mxu0 0.0
    %688 = vmatmul.mubr.f32.gmra.mxu0 %v489
    %v689 = vpop.f32.mrf.mxu0
    %v690 = vadd.f32 %v365, %v689
    %v691 = vpop.f32.mrf.mxu0
    %692 = vmatprep.mubr.f32.mxu0 0.0
    %693 = vmatmul.mubr.f32.gmra.mxu0 %v492
    %v694 = vpop.f32.mrf.mxu0
    %v695 = vadd.f32 %v370, %v694
    %v696 = vpop.f32.mrf.mxu0
    %697 = vmatprep.mubr.f32.mxu0 0.0
    %698 = vmatmul.mubr.f32.gmra.mxu0 %v495
    %v699 = vpop.f32.mrf.mxu0
    %v700 = vadd.f32 %v375, %v699
    %v701 = vpop.f32.mrf.mxu0
    %702 = vmatprep.mubr.f32.mxu0 0.0
    %703 = vmatmul.mubr.f32.gmra.mxu0 %v498
    %v704 = vpop.f32.mrf.mxu0
    %v705 = vadd.f32 %v380, %v704
    %v706 = vpop.f32.mrf.mxu0
    %707 = vmatprep.mubr.f32.mxu0 0.0
    %708 = vmatmul.mubr.f32.gmra.mxu0 %v501
    %v709 = vpop.f32.mrf.mxu0
    %v710 = vadd.f32 %v385, %v709
    %v711 = vpop.f32.mrf.mxu0
    %712 = vmatprep.mubr.f32.mxu0 0.0
    %713 = vmatmul.mubr.f32.gmra.mxu0 %v504
    %v714 = vpop.f32.mrf.mxu0
    %v715 = vadd.f32 %v390, %v714
    %v716 = vpop.f32.mrf.mxu0
    %717 = vmatprep.mubr.f32.mxu0 0.0
    %718 = vmatmul.mubr.f32.gmra.mxu0 %v507
    %v719 = vpop.f32.mrf.mxu0
    %v720 = vadd.f32 %v395, %v719
    %v721 = vpop.f32.mrf.mxu0
    %722 = vmatprep.mubr.f32.mxu0 0.0
    %723 = vmatmul.mubr.f32.gmra.mxu0 %v510
    %v724 = vpop.f32.mrf.mxu0
    %v725 = vadd.f32 %v400, %v724
    %v726 = vpop.f32.mrf.mxu0
    %727 = vmatprep.mubr.f32.mxu0 0.0
    %728 = vmatmul.mubr.f32.gmra.mxu0 %v513
    %v729 = vpop.f32.mrf.mxu0
    %v730 = vadd.f32 %v405, %v729
    %v731 = vpop.f32.mrf.mxu0
    %732 = vmatprep.mubr.f32.mxu0 0.0
    %733 = vmatmul.mubr.f32.gmra.mxu0 %v516
    %v734 = vpop.f32.mrf.mxu0
    %v735 = vadd.f32 %v410, %v734
    %v736 = vpop.f32.mrf.mxu0
    %737 = vmatprep.mubr.f32.mxu0 0.0
    %738 = vmatmul.mubr.f32.gmra.mxu0 %v519
    %v739 = vpop.f32.mrf.mxu0
    %v740 = vadd.f32 %v415, %v739
    %v741 = vpop.f32.mrf.mxu0
    %742 = vmatprep.mubr.f32.mxu0 0.0
    %743 = vmatmul.mubr.f32.gmra.mxu0 %v522
    %v744 = vpop.f32.mrf.mxu0
    %v745 = vadd.f32 %v420, %v744
    %v746 = vpop.f32.mrf.mxu0
    %747 = vmatprep.mubr.f32.mxu0 0.0
    %748 = vmatmul.mubr.f32.gmra.mxu0 %v525
    %v749 = vpop.f32.mrf.mxu0
    %v750 = vadd.f32 %v425, %v749
    %v751 = vpop.f32.mrf.mxu0
    %752 = vmatprep.mubr.f32.mxu0 0.0
    %753 = vmatmul.mubr.f32.gmra.mxu0 %v528
    %v754 = vpop.f32.mrf.mxu0
    %v755 = vadd.f32 %v430, %v754
    %v756 = vpop.f32.mrf.mxu0
    %757 = vdwg.mxu0
    %v758 = vld [vmem:[%s4] sm:$0x1]
    %v760 = vlaneseq
    %v761 = vshrl.u32 %v760, 7
    %v762 = vsub.s32 0, %v761
    %v763 = vrot.slane %v758, %v762
    %v765 = vadd.f32 %v600, %v763
    %v766 = vadd.f32 %v605, %v763
    %v767 = vadd.f32 %v610, %v763
    %v768 = vadd.f32 %v615, %v763
    %v769 = vadd.f32 %v620, %v763
    %v770 = vadd.f32 %v625, %v763
    %v771 = vadd.f32 %v630, %v763
    %v772 = vadd.f32 %v635, %v763
    %v773 = vadd.f32 %v640, %v763
    %v774 = vadd.f32 %v645, %v763
    %v775 = vadd.f32 %v650, %v763
    %v776 = vadd.f32 %v655, %v763
    %v777 = vadd.f32 %v660, %v763
    %v778 = vadd.f32 %v665, %v763
    %v779 = vadd.f32 %v670, %v763
    %v780 = vadd.f32 %v675, %v763
    %v781 = vadd.f32 %v680, %v763
    %v782 = vadd.f32 %v685, %v763
    %v783 = vadd.f32 %v690, %v763
    %v784 = vadd.f32 %v695, %v763
    %v785 = vadd.f32 %v700, %v763
    %v786 = vadd.f32 %v705, %v763
    %v787 = vadd.f32 %v710, %v763
    %v788 = vadd.f32 %v715, %v763
    %v789 = vadd.f32 %v720, %v763
    %v790 = vadd.f32 %v725, %v763
    %v791 = vadd.f32 %v730, %v763
    %v792 = vadd.f32 %v735, %v763
    %v793 = vadd.f32 %v740, %v763
    %v794 = vadd.f32 %v745, %v763
    %v795 = vadd.f32 %v750, %v763
    %v796 = vadd.f32 %v755, %v763
    %v797 = vmax.f32 %v765, 0.0
    %v798 = vmax.f32 %v766, 0.0
    %v799 = vmax.f32 %v767, 0.0
    %v800 = vmax.f32 %v768, 0.0
    %v801 = vmax.f32 %v769, 0.0
    %v802 = vmax.f32 %v770, 0.0
    %v803 = vmax.f32 %v771, 0.0
    %v804 = vmax.f32 %v772, 0.0
    %v805 = vmax.f32 %v773, 0.0
    %v806 = vmax.f32 %v774, 0.0
    %v807 = vmax.f32 %v775, 0.0
    %v808 = vmax.f32 %v776, 0.0
    %v809 = vmax.f32 %v777, 0.0
    %v810 = vmax.f32 %v778, 0.0
    %v811 = vmax.f32 %v779, 0.0
    %v812 = vmax.f32 %v780, 0.0
    %v813 = vmax.f32 %v781, 0.0
    %v814 = vmax.f32 %v782, 0.0
    %v815 = vmax.f32 %v783, 0.0
    %v816 = vmax.f32 %v784, 0.0
    %v817 = vmax.f32 %v785, 0.0
    %v818 = vmax.f32 %v786, 0.0
    %v819 = vmax.f32 %v787, 0.0
    %v820 = vmax.f32 %v788, 0.0
    %v821 = vmax.f32 %v789, 0.0
    %v822 = vmax.f32 %v790, 0.0
    %v823 = vmax.f32 %v791, 0.0
    %v824 = vmax.f32 %v792, 0.0
    %v825 = vmax.f32 %v793, 0.0
    %v826 = vmax.f32 %v794, 0.0
    %v827 = vmax.f32 %v795, 0.0
    %v828 = vmax.f32 %v796, 0.0
    %v829 = vld [vmem:[%s5] sm:$0xff]
    %v830 = vld [vmem:[%s5 + $0x8] sm:$0xff]
    %v831 = vld [vmem:[%s5 + $0x10] sm:$0xff]
    %v832 = vld [vmem:[%s5 + $0x18] sm:$0xff]
    %v833 = vld [vmem:[%s6] sm:$0x1]
    %v835 = vlaneseq
    %v836 = vshrl.u32 %v835, 7
    %v837 = vsub.s32 0, %v836
    %v838 = vrot.slane %v833, %v837
    %vm840 = vcmask 261120
    %v842 = vsel %vm840, %v797, 0
    %v845 = vsel %vm840, %v798, 0
    %v848 = vsel %vm840, %v799, 0
    %v851 = vsel %vm840, %v800, 0
    %v854 = vsel %vm840, %v801, 0
    %v857 = vsel %vm840, %v802, 0
    %v860 = vsel %vm840, %v803, 0
    %v863 = vsel %vm840, %v804, 0
    %v866 = vsel %vm840, %v805, 0
    %v869 = vsel %vm840, %v806, 0
    %v872 = vsel %vm840, %v807, 0
    %v875 = vsel %vm840, %v808, 0
    %v878 = vsel %vm840, %v809, 0
    %v881 = vsel %vm840, %v810, 0
    %v884 = vsel %vm840, %v811, 0
    %v887 = vsel %vm840, %v812, 0
    %v890 = vsel %vm840, %v813, 0
    %v893 = vsel %vm840, %v814, 0
    %v896 = vsel %vm840, %v815, 0
    %v899 = vsel %vm840, %v816, 0
    %v902 = vsel %vm840, %v817, 0
    %v905 = vsel %vm840, %v818, 0
    %v908 = vsel %vm840, %v819, 0
    %v911 = vsel %vm840, %v820, 0
    %v914 = vsel %vm840, %v821, 0
    %v917 = vsel %vm840, %v822, 0
    %v920 = vsel %vm840, %v823, 0
    %v923 = vsel %vm840, %v824, 0
    %v926 = vsel %vm840, %v825, 0
    %v929 = vsel %vm840, %v826, 0
    %v932 = vsel %vm840, %v827, 0
    %v935 = vsel %vm840, %v828, 0
    %937 = vmatprep.subr.mxu0 0.0
    %938 = vmatpush1.msra.mxu0 0.0
    %939 = vmatprep.subr.mxu0 0.0
    %940 = vmatpush1.msra.mxu0 0.0
    %941 = vmatprep.subr.mxu0 0.0
    %942 = vmatpush1.msra.mxu0 0.0
    %943 = vmatprep.subr.mxu0 0.0
    %944 = vmatpush1.msra.mxu0 0.0
    %945 = vmatprep.subr.mxu0 0.0
    %946 = vmatpush1.msra.mxu0 0.0
    %947 = vmatprep.subr.mxu0 0.0
    %948 = vmatpush1.msra.mxu0 0.0
    %949 = vmatprep.subr.mxu0 0.0
    %950 = vmatpush1.msra.mxu0 0.0
    %951 = vmatprep.subr.mxu0 0.0
    %952 = vmatpush1.msra.mxu0 0.0
    %953 = vmatprep.subr.mxu0 0.0
    %954 = vmatpush1.msra.mxu0 0.0
    %955 = vmatprep.subr.mxu0 0.0
    %956 = vmatpush1.msra.mxu0 0.0
    %957 = vmatprep.subr.mxu0 0.0
    %958 = vmatpush1.msra.mxu0 0.0
    %959 = vmatprep.subr.mxu0 0.0
    %960 = vmatpush1.msra.mxu0 0.0
    %961 = vmatprep.subr.mxu0 0.0
    %962 = vmatpush1.msra.mxu0 %v832
    %963 = vmatprep.subr.mxu0 0.0
    %964 = vmatpush1.msra.mxu0 %v831
    %965 = vmatprep.subr.mxu0 0.0
    %966 = vmatpush1.msra.mxu0 %v830
    %967 = vmatprep.subr.mxu0 0.0
    %968 = vmatpush1.msra.mxu0 %v829
    %969 = vmatprep.subr.mxu0 0.0
    %970 = vmatpush2.msra.mxu0 0.0
    %971 = vmatprep.subr.mxu0 0.0
    %972 = vmatpush2.msra.mxu0 0.0
    %973 = vmatprep.subr.mxu0 0.0
    %974 = vmatpush2.msra.mxu0 0.0
    %975 = vmatprep.subr.mxu0 0.0
    %976 = vmatpush2.msra.mxu0 0.0
    %977 = vmatprep.subr.mxu0 0.0
    %978 = vmatpush2.msra.mxu0 0.0
    %979 = vmatprep.subr.mxu0 0.0
    %980 = vmatpush2.msra.mxu0 0.0
    %981 = vmatprep.subr.mxu0 0.0
    %982 = vmatpush2.msra.mxu0 0.0
    %983 = vmatprep.subr.mxu0 0.0
    %984 = vmatpush2.msra.mxu0 0.0
    %985 = vmatprep.subr.mxu0 0.0
    %986 = vmatpush2.msra.mxu0 0.0
    %987 = vmatprep.subr.mxu0 0.0
    %988 = vmatpush2.msra.mxu0 0.0
    %989 = vmatprep.subr.mxu0 0.0
    %990 = vmatpush2.msra.mxu0 0.0
    %991 = vmatprep.subr.mxu0 0.0
    %992 = vmatpush2.msra.mxu0 0.0
    %993 = vmatprep.subr.mxu0 0.0
    %994 = vmatpush2.msra.mxu0 0.0
    %995 = vmatprep.subr.mxu0 0.0
    %996 = vmatpush2.msra.mxu0 0.0
    %997 = vmatprep.subr.mxu0 0.0
    %998 = vmatpush2.msra.mxu0 0.0
    %999 = vmatprep.subr.mxu0 0.0
    %1000 = vmatpush2.msra.mxu0 0.0
    %1001 = vmatprep.mubr.f32.mxu0 0.0
    %1002 = vmatmul.mubr.f32.gmra.mxu0 %v842
    %v1003 = vpop.f32.mrf.mxu0
    %v1004 = vadd.f32 %v838, %v1003
    %v1005 = vpop.f32.mrf.mxu0
    %1006 = vmatprep.mubr.f32.mxu0 0.0
    %1007 = vmatmul.mubr.f32.gmra.mxu0 %v845
    %v1008 = vpop.f32.mrf.mxu0
    %v1009 = vadd.f32 %v838, %v1008
    %v1010 = vpop.f32.mrf.mxu0
    %1011 = vmatprep.mubr.f32.mxu0 0.0
    %1012 = vmatmul.mubr.f32.gmra.mxu0 %v848
    %v1013 = vpop.f32.mrf.mxu0
    %v1014 = vadd.f32 %v838, %v1013
    %v1015 = vpop.f32.mrf.mxu0
    %1016 = vmatprep.mubr.f32.mxu0 0.0
    %1017 = vmatmul.mubr.f32.gmra.mxu0 %v851
    %v1018 = vpop.f32.mrf.mxu0
    %v1019 = vadd.f32 %v838, %v1018
    %v1020 = vpop.f32.mrf.mxu0
    %1021 = vmatprep.mubr.f32.mxu0 0.0
    %1022 = vmatmul.mubr.f32.gmra.mxu0 %v854
    %v1023 = vpop.f32.mrf.mxu0
    %v1024 = vadd.f32 %v838, %v1023
    %v1025 = vpop.f32.mrf.mxu0
    %1026 = vmatprep.mubr.f32.mxu0 0.0
    %1027 = vmatmul.mubr.f32.gmra.mxu0 %v857
    %v1028 = vpop.f32.mrf.mxu0
    %v1029 = vadd.f32 %v838, %v1028
    %v1030 = vpop.f32.mrf.mxu0
    %1031 = vmatprep.mubr.f32.mxu0 0.0
    %1032 = vmatmul.mubr.f32.gmra.mxu0 %v860
    %v1033 = vpop.f32.mrf.mxu0
    %v1034 = vadd.f32 %v838, %v1033
    %v1035 = vpop.f32.mrf.mxu0
    %1036 = vmatprep.mubr.f32.mxu0 0.0
    %1037 = vmatmul.mubr.f32.gmra.mxu0 %v863
    %v1038 = vpop.f32.mrf.mxu0
    %v1039 = vadd.f32 %v838, %v1038
    %v1040 = vpop.f32.mrf.mxu0
    %1041 = vmatprep.mubr.f32.mxu0 0.0
    %1042 = vmatmul.mubr.f32.gmra.mxu0 %v866
    %v1043 = vpop.f32.mrf.mxu0
    %v1044 = vadd.f32 %v838, %v1043
    %v1045 = vpop.f32.mrf.mxu0
    %1046 = vmatprep.mubr.f32.mxu0 0.0
    %1047 = vmatmul.mubr.f32.gmra.mxu0 %v869
    %v1048 = vpop.f32.mrf.mxu0
    %v1049 = vadd.f32 %v838, %v1048
    %v1050 = vpop.f32.mrf.mxu0
    %1051 = vmatprep.mubr.f32.mxu0 0.0
    %1052 = vmatmul.mubr.f32.gmra.mxu0 %v872
    %v1053 = vpop.f32.mrf.mxu0
    %v1054 = vadd.f32 %v838, %v1053
    %v1055 = vpop.f32.mrf.mxu0
    %1056 = vmatprep.mubr.f32.mxu0 0.0
    %1057 = vmatmul.mubr.f32.gmra.mxu0 %v875
    %v1058 = vpop.f32.mrf.mxu0
    %v1059 = vadd.f32 %v838, %v1058
    %v1060 = vpop.f32.mrf.mxu0
    %1061 = vmatprep.mubr.f32.mxu0 0.0
    %1062 = vmatmul.mubr.f32.gmra.mxu0 %v878
    %v1063 = vpop.f32.mrf.mxu0
    %v1064 = vadd.f32 %v838, %v1063
    %v1065 = vpop.f32.mrf.mxu0
    %1066 = vmatprep.mubr.f32.mxu0 0.0
    %1067 = vmatmul.mubr.f32.gmra.mxu0 %v881
    %v1068 = vpop.f32.mrf.mxu0
    %v1069 = vadd.f32 %v838, %v1068
    %v1070 = vpop.f32.mrf.mxu0
    %1071 = vmatprep.mubr.f32.mxu0 0.0
    %1072 = vmatmul.mubr.f32.gmra.mxu0 %v884
    %v1073 = vpop.f32.mrf.mxu0
    %v1074 = vadd.f32 %v838, %v1073
    %v1075 = vpop.f32.mrf.mxu0
    %1076 = vmatprep.mubr.f32.mxu0 0.0
    %1077 = vmatmul.mubr.f32.gmra.mxu0 %v887
    %v1078 = vpop.f32.mrf.mxu0
    %v1079 = vadd.f32 %v838, %v1078
    %v1080 = vpop.f32.mrf.mxu0
    %1081 = vmatprep.mubr.f32.mxu0 0.0
    %1082 = vmatmul.mubr.f32.gmra.mxu0 %v890
    %v1083 = vpop.f32.mrf.mxu0
    %v1084 = vadd.f32 %v838, %v1083
    %v1085 = vpop.f32.mrf.mxu0
    %1086 = vmatprep.mubr.f32.mxu0 0.0
    %1087 = vmatmul.mubr.f32.gmra.mxu0 %v893
    %v1088 = vpop.f32.mrf.mxu0
    %v1089 = vadd.f32 %v838, %v1088
    %v1090 = vpop.f32.mrf.mxu0
    %1091 = vmatprep.mubr.f32.mxu0 0.0
    %1092 = vmatmul.mubr.f32.gmra.mxu0 %v896
    %v1093 = vpop.f32.mrf.mxu0
    %v1094 = vadd.f32 %v838, %v1093
    %v1095 = vpop.f32.mrf.mxu0
    %1096 = vmatprep.mubr.f32.mxu0 0.0
    %1097 = vmatmul.mubr.f32.gmra.mxu0 %v899
    %v1098 = vpop.f32.mrf.mxu0
    %v1099 = vadd.f32 %v838, %v1098
    %v1100 = vpop.f32.mrf.mxu0
    %1101 = vmatprep.mubr.f32.mxu0 0.0
    %1102 = vmatmul.mubr.f32.gmra.mxu0 %v902
    %v1103 = vpop.f32.mrf.mxu0
    %v1104 = vadd.f32 %v838, %v1103
    %v1105 = vpop.f32.mrf.mxu0
    %1106 = vmatprep.mubr.f32.mxu0 0.0
    %1107 = vmatmul.mubr.f32.gmra.mxu0 %v905
    %v1108 = vpop.f32.mrf.mxu0
    %v1109 = vadd.f32 %v838, %v1108
    %v1110 = vpop.f32.mrf.mxu0
    %1111 = vmatprep.mubr.f32.mxu0 0.0
    %1112 = vmatmul.mubr.f32.gmra.mxu0 %v908
    %v1113 = vpop.f32.mrf.mxu0
    %v1114 = vadd.f32 %v838, %v1113
    %v1115 = vpop.f32.mrf.mxu0
    %1116 = vmatprep.mubr.f32.mxu0 0.0
    %1117 = vmatmul.mubr.f32.gmra.mxu0 %v911
    %v1118 = vpop.f32.mrf.mxu0
    %v1119 = vadd.f32 %v838, %v1118
    %v1120 = vpop.f32.mrf.mxu0
    %1121 = vmatprep.mubr.f32.mxu0 0.0
    %1122 = vmatmul.mubr.f32.gmra.mxu0 %v914
    %v1123 = vpop.f32.mrf.mxu0
    %v1124 = vadd.f32 %v838, %v1123
    %v1125 = vpop.f32.mrf.mxu0
    %1126 = vmatprep.mubr.f32.mxu0 0.0
    %1127 = vmatmul.mubr.f32.gmra.mxu0 %v917
    %v1128 = vpop.f32.mrf.mxu0
    %v1129 = vadd.f32 %v838, %v1128
    %v1130 = vpop.f32.mrf.mxu0
    %1131 = vmatprep.mubr.f32.mxu0 0.0
    %1132 = vmatmul.mubr.f32.gmra.mxu0 %v920
    %v1133 = vpop.f32.mrf.mxu0
    %v1134 = vadd.f32 %v838, %v1133
    %v1135 = vpop.f32.mrf.mxu0
    %1136 = vmatprep.mubr.f32.mxu0 0.0
    %1137 = vmatmul.mubr.f32.gmra.mxu0 %v923
    %v1138 = vpop.f32.mrf.mxu0
    %v1139 = vadd.f32 %v838, %v1138
    %v1140 = vpop.f32.mrf.mxu0
    %1141 = vmatprep.mubr.f32.mxu0 0.0
    %1142 = vmatmul.mubr.f32.gmra.mxu0 %v926
    %v1143 = vpop.f32.mrf.mxu0
    %v1144 = vadd.f32 %v838, %v1143
    %v1145 = vpop.f32.mrf.mxu0
    %1146 = vmatprep.mubr.f32.mxu0 0.0
    %1147 = vmatmul.mubr.f32.gmra.mxu0 %v929
    %v1148 = vpop.f32.mrf.mxu0
    %v1149 = vadd.f32 %v838, %v1148
    %v1150 = vpop.f32.mrf.mxu0
    %1151 = vmatprep.mubr.f32.mxu0 0.0
    %1152 = vmatmul.mubr.f32.gmra.mxu0 %v932
    %v1153 = vpop.f32.mrf.mxu0
    %v1154 = vadd.f32 %v838, %v1153
    %v1155 = vpop.f32.mrf.mxu0
    %1156 = vmatprep.mubr.f32.mxu0 0.0
    %1157 = vmatmul.mubr.f32.gmra.mxu0 %v935
    %v1158 = vpop.f32.mrf.mxu0
    %v1159 = vadd.f32 %v838, %v1158
    %v1160 = vpop.f32.mrf.mxu0
    %1161 = vdwg.mxu0
    %v1162 = vmax.f32 %v1004, 0.0
    %v1163 = vmax.f32 %v1009, 0.0
    %v1164 = vmax.f32 %v1014, 0.0
    %v1165 = vmax.f32 %v1019, 0.0
    %v1166 = vmax.f32 %v1024, 0.0
    %v1167 = vmax.f32 %v1029, 0.0
    %v1168 = vmax.f32 %v1034, 0.0
    %v1169 = vmax.f32 %v1039, 0.0
    %v1170 = vmax.f32 %v1044, 0.0
    %v1171 = vmax.f32 %v1049, 0.0
    %v1172 = vmax.f32 %v1054, 0.0
    %v1173 = vmax.f32 %v1059, 0.0
    %v1174 = vmax.f32 %v1064, 0.0
    %v1175 = vmax.f32 %v1069, 0.0
    %v1176 = vmax.f32 %v1074, 0.0
    %v1177 = vmax.f32 %v1079, 0.0
    %v1178 = vmax.f32 %v1084, 0.0
    %v1179 = vmax.f32 %v1089, 0.0
    %v1180 = vmax.f32 %v1094, 0.0
    %v1181 = vmax.f32 %v1099, 0.0
    %v1182 = vmax.f32 %v1104, 0.0
    %v1183 = vmax.f32 %v1109, 0.0
    %v1184 = vmax.f32 %v1114, 0.0
    %v1185 = vmax.f32 %v1119, 0.0
    %v1186 = vmax.f32 %v1124, 0.0
    %v1187 = vmax.f32 %v1129, 0.0
    %v1188 = vmax.f32 %v1134, 0.0
    %v1189 = vmax.f32 %v1139, 0.0
    %v1190 = vmax.f32 %v1144, 0.0
    %v1191 = vmax.f32 %v1149, 0.0
    %v1192 = vmax.f32 %v1154, 0.0
    %v1193 = vmax.f32 %v1159, 0.0
    %v1194 = vld [vmem:[%s7] sm:$0xff]
    %v1195 = vld [vmem:[%s7 + $0x8] sm:$0xff]
    %v1196 = vld [vmem:[%s7 + $0x10] sm:$0xff]
    %v1197 = vld [vmem:[%s7 + $0x18] sm:$0xff]
    %v1198 = vld [vmem:[%s8] sm:$0x1]
    %v1200 = vlaneseq
    %v1201 = vshrl.u32 %v1200, 7
    %v1202 = vsub.s32 0, %v1201
    %v1203 = vrot.slane %v1198, %v1202
    %v1206 = vsel %vm840, %v1162, 0
    %v1209 = vsel %vm840, %v1163, 0
    %v1212 = vsel %vm840, %v1164, 0
    %v1215 = vsel %vm840, %v1165, 0
    %v1218 = vsel %vm840, %v1166, 0
    %v1221 = vsel %vm840, %v1167, 0
    %v1224 = vsel %vm840, %v1168, 0
    %v1227 = vsel %vm840, %v1169, 0
    %v1230 = vsel %vm840, %v1170, 0
    %v1233 = vsel %vm840, %v1171, 0
    %v1236 = vsel %vm840, %v1172, 0
    %v1239 = vsel %vm840, %v1173, 0
    %v1242 = vsel %vm840, %v1174, 0
    %v1245 = vsel %vm840, %v1175, 0
    %v1248 = vsel %vm840, %v1176, 0
    %v1251 = vsel %vm840, %v1177, 0
    %v1254 = vsel %vm840, %v1178, 0
    %v1257 = vsel %vm840, %v1179, 0
    %v1260 = vsel %vm840, %v1180, 0
    %v1263 = vsel %vm840, %v1181, 0
    %v1266 = vsel %vm840, %v1182, 0
    %v1269 = vsel %vm840, %v1183, 0
    %v1272 = vsel %vm840, %v1184, 0
    %v1275 = vsel %vm840, %v1185, 0
    %v1278 = vsel %vm840, %v1186, 0
    %v1281 = vsel %vm840, %v1187, 0
    %v1284 = vsel %vm840, %v1188, 0
    %v1287 = vsel %vm840, %v1189, 0
    %v1290 = vsel %vm840, %v1190, 0
    %v1293 = vsel %vm840, %v1191, 0
    %v1296 = vsel %vm840, %v1192, 0
    %v1299 = vsel %vm840, %v1193, 0
    %1301 = vmatprep.subr.mxu0 0.0
    %1302 = vmatpush1.msra.mxu0 0.0
    %1303 = vmatprep.subr.mxu0 0.0
    %1304 = vmatpush1.msra.mxu0 0.0
    %1305 = vmatprep.subr.mxu0 0.0
    %1306 = vmatpush1.msra.mxu0 0.0
    %1307 = vmatprep.subr.mxu0 0.0
    %1308 = vmatpush1.msra.mxu0 0.0
    %1309 = vmatprep.subr.mxu0 0.0
    %1310 = vmatpush1.msra.mxu0 0.0
    %1311 = vmatprep.subr.mxu0 0.0
    %1312 = vmatpush1.msra.mxu0 0.0
    %1313 = vmatprep.subr.mxu0 0.0
    %1314 = vmatpush1.msra.mxu0 0.0
    %1315 = vmatprep.subr.mxu0 0.0
    %1316 = vmatpush1.msra.mxu0 0.0
    %1317 = vmatprep.subr.mxu0 0.0
    %1318 = vmatpush1.msra.mxu0 0.0
    %1319 = vmatprep.subr.mxu0 0.0
    %1320 = vmatpush1.msra.mxu0 0.0
    %1321 = vmatprep.subr.mxu0 0.0
    %1322 = vmatpush1.msra.mxu0 0.0
    %1323 = vmatprep.subr.mxu0 0.0
    %1324 = vmatpush1.msra.mxu0 0.0
    %1325 = vmatprep.subr.mxu0 0.0
    %1326 = vmatpush1.msra.mxu0 %v1197
    %1327 = vmatprep.subr.mxu0 0.0
    %1328 = vmatpush1.msra.mxu0 %v1196
    %1329 = vmatprep.subr.mxu0 0.0
    %1330 = vmatpush1.msra.mxu0 %v1195
    %1331 = vmatprep.subr.mxu0 0.0
    %1332 = vmatpush1.msra.mxu0 %v1194
    %1333 = vmatprep.subr.mxu0 0.0
    %1334 = vmatpush2.msra.mxu0 0.0
    %1335 = vmatprep.subr.mxu0 0.0
    %1336 = vmatpush2.msra.mxu0 0.0
    %1337 = vmatprep.subr.mxu0 0.0
    %1338 = vmatpush2.msra.mxu0 0.0
    %1339 = vmatprep.subr.mxu0 0.0
    %1340 = vmatpush2.msra.mxu0 0.0
    %1341 = vmatprep.subr.mxu0 0.0
    %1342 = vmatpush2.msra.mxu0 0.0
    %1343 = vmatprep.subr.mxu0 0.0
    %1344 = vmatpush2.msra.mxu0 0.0
    %1345 = vmatprep.subr.mxu0 0.0
    %1346 = vmatpush2.msra.mxu0 0.0
    %1347 = vmatprep.subr.mxu0 0.0
    %1348 = vmatpush2.msra.mxu0 0.0
    %1349 = vmatprep.subr.mxu0 0.0
    %1350 = vmatpush2.msra.mxu0 0.0
    %1351 = vmatprep.subr.mxu0 0.0
    %1352 = vmatpush2.msra.mxu0 0.0
    %1353 = vmatprep.subr.mxu0 0.0
    %1354 = vmatpush2.msra.mxu0 0.0
    %1355 = vmatprep.subr.mxu0 0.0
    %1356 = vmatpush2.msra.mxu0 0.0
    %1357 = vmatprep.subr.mxu0 0.0
    %1358 = vmatpush2.msra.mxu0 0.0
    %1359 = vmatprep.subr.mxu0 0.0
    %1360 = vmatpush2.msra.mxu0 0.0
    %1361 = vmatprep.subr.mxu0 0.0
    %1362 = vmatpush2.msra.mxu0 0.0
    %1363 = vmatprep.subr.mxu0 0.0
    %1364 = vmatpush2.msra.mxu0 0.0
    %1365 = vmatprep.mubr.f32.mxu0 0.0
    %1366 = vmatmul.mubr.f32.gmra.mxu0 %v1206
    %v1367 = vpop.f32.mrf.mxu0
    %v1368 = vadd.f32 %v1203, %v1367
    %v1369 = vpop.f32.mrf.mxu0
    %1370 = vmatprep.mubr.f32.mxu0 0.0
    %1371 = vmatmul.mubr.f32.gmra.mxu0 %v1209
    %v1372 = vpop.f32.mrf.mxu0
    %v1373 = vadd.f32 %v1203, %v1372
    %v1374 = vpop.f32.mrf.mxu0
    %1375 = vmatprep.mubr.f32.mxu0 0.0
    %1376 = vmatmul.mubr.f32.gmra.mxu0 %v1212
    %v1377 = vpop.f32.mrf.mxu0
    %v1378 = vadd.f32 %v1203, %v1377
    %v1379 = vpop.f32.mrf.mxu0
    %1380 = vmatprep.mubr.f32.mxu0 0.0
    %1381 = vmatmul.mubr.f32.gmra.mxu0 %v1215
    %v1382 = vpop.f32.mrf.mxu0
    %v1383 = vadd.f32 %v1203, %v1382
    %v1384 = vpop.f32.mrf.mxu0
    %1385 = vmatprep.mubr.f32.mxu0 0.0
    %1386 = vmatmul.mubr.f32.gmra.mxu0 %v1218
    %v1387 = vpop.f32.mrf.mxu0
    %v1388 = vadd.f32 %v1203, %v1387
    %v1389 = vpop.f32.mrf.mxu0
    %1390 = vmatprep.mubr.f32.mxu0 0.0
    %1391 = vmatmul.mubr.f32.gmra.mxu0 %v1221
    %v1392 = vpop.f32.mrf.mxu0
    %v1393 = vadd.f32 %v1203, %v1392
    %v1394 = vpop.f32.mrf.mxu0
    %1395 = vmatprep.mubr.f32.mxu0 0.0
    %1396 = vmatmul.mubr.f32.gmra.mxu0 %v1224
    %v1397 = vpop.f32.mrf.mxu0
    %v1398 = vadd.f32 %v1203, %v1397
    %v1399 = vpop.f32.mrf.mxu0
    %1400 = vmatprep.mubr.f32.mxu0 0.0
    %1401 = vmatmul.mubr.f32.gmra.mxu0 %v1227
    %v1402 = vpop.f32.mrf.mxu0
    %v1403 = vadd.f32 %v1203, %v1402
    %v1404 = vpop.f32.mrf.mxu0
    %1405 = vmatprep.mubr.f32.mxu0 0.0
    %1406 = vmatmul.mubr.f32.gmra.mxu0 %v1230
    %v1407 = vpop.f32.mrf.mxu0
    %v1408 = vadd.f32 %v1203, %v1407
    %v1409 = vpop.f32.mrf.mxu0
    %1410 = vmatprep.mubr.f32.mxu0 0.0
    %1411 = vmatmul.mubr.f32.gmra.mxu0 %v1233
    %v1412 = vpop.f32.mrf.mxu0
    %v1413 = vadd.f32 %v1203, %v1412
    %v1414 = vpop.f32.mrf.mxu0
    %1415 = vmatprep.mubr.f32.mxu0 0.0
    %1416 = vmatmul.mubr.f32.gmra.mxu0 %v1236
    %v1417 = vpop.f32.mrf.mxu0
    %v1418 = vadd.f32 %v1203, %v1417
    %v1419 = vpop.f32.mrf.mxu0
    %1420 = vmatprep.mubr.f32.mxu0 0.0
    %1421 = vmatmul.mubr.f32.gmra.mxu0 %v1239
    %v1422 = vpop.f32.mrf.mxu0
    %v1423 = vadd.f32 %v1203, %v1422
    %v1424 = vpop.f32.mrf.mxu0
    %1425 = vmatprep.mubr.f32.mxu0 0.0
    %1426 = vmatmul.mubr.f32.gmra.mxu0 %v1242
    %v1427 = vpop.f32.mrf.mxu0
    %v1428 = vadd.f32 %v1203, %v1427
    %v1429 = vpop.f32.mrf.mxu0
    %1430 = vmatprep.mubr.f32.mxu0 0.0
    %1431 = vmatmul.mubr.f32.gmra.mxu0 %v1245
    %v1432 = vpop.f32.mrf.mxu0
    %v1433 = vadd.f32 %v1203, %v1432
    %v1434 = vpop.f32.mrf.mxu0
    %1435 = vmatprep.mubr.f32.mxu0 0.0
    %1436 = vmatmul.mubr.f32.gmra.mxu0 %v1248
    %v1437 = vpop.f32.mrf.mxu0
    %v1438 = vadd.f32 %v1203, %v1437
    %v1439 = vpop.f32.mrf.mxu0
    %1440 = vmatprep.mubr.f32.mxu0 0.0
    %1441 = vmatmul.mubr.f32.gmra.mxu0 %v1251
    %v1442 = vpop.f32.mrf.mxu0
    %v1443 = vadd.f32 %v1203, %v1442
    %v1444 = vpop.f32.mrf.mxu0
    %1445 = vmatprep.mubr.f32.mxu0 0.0
    %1446 = vmatmul.mubr.f32.gmra.mxu0 %v1254
    %v1447 = vpop.f32.mrf.mxu0
    %v1448 = vadd.f32 %v1203, %v1447
    %v1449 = vpop.f32.mrf.mxu0
    %1450 = vmatprep.mubr.f32.mxu0 0.0
    %1451 = vmatmul.mubr.f32.gmra.mxu0 %v1257
    %v1452 = vpop.f32.mrf.mxu0
    %v1453 = vadd.f32 %v1203, %v1452
    %v1454 = vpop.f32.mrf.mxu0
    %1455 = vmatprep.mubr.f32.mxu0 0.0
    %1456 = vmatmul.mubr.f32.gmra.mxu0 %v1260
    %v1457 = vpop.f32.mrf.mxu0
    %v1458 = vadd.f32 %v1203, %v1457
    %v1459 = vpop.f32.mrf.mxu0
    %1460 = vmatprep.mubr.f32.mxu0 0.0
    %1461 = vmatmul.mubr.f32.gmra.mxu0 %v1263
    %v1462 = vpop.f32.mrf.mxu0
    %v1463 = vadd.f32 %v1203, %v1462
    %v1464 = vpop.f32.mrf.mxu0
    %1465 = vmatprep.mubr.f32.mxu0 0.0
    %1466 = vmatmul.mubr.f32.gmra.mxu0 %v1266
    %v1467 = vpop.f32.mrf.mxu0
    %v1468 = vadd.f32 %v1203, %v1467
    %v1469 = vpop.f32.mrf.mxu0
    %1470 = vmatprep.mubr.f32.mxu0 0.0
    %1471 = vmatmul.mubr.f32.gmra.mxu0 %v1269
    %v1472 = vpop.f32.mrf.mxu0
    %v1473 = vadd.f32 %v1203, %v1472
    %v1474 = vpop.f32.mrf.mxu0
    %1475 = vmatprep.mubr.f32.mxu0 0.0
    %1476 = vmatmul.mubr.f32.gmra.mxu0 %v1272
    %v1477 = vpop.f32.mrf.mxu0
    %v1478 = vadd.f32 %v1203, %v1477
    %v1479 = vpop.f32.mrf.mxu0
    %1480 = vmatprep.mubr.f32.mxu0 0.0
    %1481 = vmatmul.mubr.f32.gmra.mxu0 %v1275
    %v1482 = vpop.f32.mrf.mxu0
    %v1483 = vadd.f32 %v1203, %v1482
    %v1484 = vpop.f32.mrf.mxu0
    %1485 = vmatprep.mubr.f32.mxu0 0.0
    %1486 = vmatmul.mubr.f32.gmra.mxu0 %v1278
    %v1487 = vpop.f32.mrf.mxu0
    %v1488 = vadd.f32 %v1203, %v1487
    %v1489 = vpop.f32.mrf.mxu0
    %1490 = vmatprep.mubr.f32.mxu0 0.0
    %1491 = vmatmul.mubr.f32.gmra.mxu0 %v1281
    %v1492 = vpop.f32.mrf.mxu0
    %v1493 = vadd.f32 %v1203, %v1492
    %v1494 = vpop.f32.mrf.mxu0
    %1495 = vmatprep.mubr.f32.mxu0 0.0
    %1496 = vmatmul.mubr.f32.gmra.mxu0 %v1284
    %v1497 = vpop.f32.mrf.mxu0
    %v1498 = vadd.f32 %v1203, %v1497
    %v1499 = vpop.f32.mrf.mxu0
    %1500 = vmatprep.mubr.f32.mxu0 0.0
    %1501 = vmatmul.mubr.f32.gmra.mxu0 %v1287
    %v1502 = vpop.f32.mrf.mxu0
    %v1503 = vadd.f32 %v1203, %v1502
    %v1504 = vpop.f32.mrf.mxu0
    %1505 = vmatprep.mubr.f32.mxu0 0.0
    %1506 = vmatmul.mubr.f32.gmra.mxu0 %v1290
    %v1507 = vpop.f32.mrf.mxu0
    %v1508 = vadd.f32 %v1203, %v1507
    %v1509 = vpop.f32.mrf.mxu0
    %1510 = vmatprep.mubr.f32.mxu0 0.0
    %1511 = vmatmul.mubr.f32.gmra.mxu0 %v1293
    %v1512 = vpop.f32.mrf.mxu0
    %v1513 = vadd.f32 %v1203, %v1512
    %v1514 = vpop.f32.mrf.mxu0
    %1515 = vmatprep.mubr.f32.mxu0 0.0
    %1516 = vmatmul.mubr.f32.gmra.mxu0 %v1296
    %v1517 = vpop.f32.mrf.mxu0
    %v1518 = vadd.f32 %v1203, %v1517
    %v1519 = vpop.f32.mrf.mxu0
    %1520 = vmatprep.mubr.f32.mxu0 0.0
    %1521 = vmatmul.mubr.f32.gmra.mxu0 %v1299
    %v1522 = vpop.f32.mrf.mxu0
    %v1523 = vadd.f32 %v1203, %v1522
    %v1524 = vpop.f32.mrf.mxu0
    %1525 = vdwg.mxu0
    %v1526 = vmax.f32 %v1368, 0.0
    %v1527 = vmax.f32 %v1373, 0.0
    %v1528 = vmax.f32 %v1378, 0.0
    %v1529 = vmax.f32 %v1383, 0.0
    %v1530 = vmax.f32 %v1388, 0.0
    %v1531 = vmax.f32 %v1393, 0.0
    %v1532 = vmax.f32 %v1398, 0.0
    %v1533 = vmax.f32 %v1403, 0.0
    %v1534 = vmax.f32 %v1408, 0.0
    %v1535 = vmax.f32 %v1413, 0.0
    %v1536 = vmax.f32 %v1418, 0.0
    %v1537 = vmax.f32 %v1423, 0.0
    %v1538 = vmax.f32 %v1428, 0.0
    %v1539 = vmax.f32 %v1433, 0.0
    %v1540 = vmax.f32 %v1438, 0.0
    %v1541 = vmax.f32 %v1443, 0.0
    %v1542 = vmax.f32 %v1448, 0.0
    %v1543 = vmax.f32 %v1453, 0.0
    %v1544 = vmax.f32 %v1458, 0.0
    %v1545 = vmax.f32 %v1463, 0.0
    %v1546 = vmax.f32 %v1468, 0.0
    %v1547 = vmax.f32 %v1473, 0.0
    %v1548 = vmax.f32 %v1478, 0.0
    %v1549 = vmax.f32 %v1483, 0.0
    %v1550 = vmax.f32 %v1488, 0.0
    %v1551 = vmax.f32 %v1493, 0.0
    %v1552 = vmax.f32 %v1498, 0.0
    %v1553 = vmax.f32 %v1503, 0.0
    %v1554 = vmax.f32 %v1508, 0.0
    %v1555 = vmax.f32 %v1513, 0.0
    %v1556 = vmax.f32 %v1518, 0.0
    %v1557 = vmax.f32 %v1523, 0.0
    %v1558 = vld [vmem:[%s9] sm:$0x1]
    %s1559 = sld [smem:[#allocation2]]
    %v1560 = vstv %s1559
    %v1562 = vsel %vm840, %v1558, 0
    %v1565 = vsel %vm840, %v1526, 0
    %v1568 = vsel %vm840, %v1527, 0
    %v1571 = vsel %vm840, %v1528, 0
    %v1574 = vsel %vm840, %v1529, 0
    %v1577 = vsel %vm840, %v1530, 0
    %v1580 = vsel %vm840, %v1531, 0
    %v1583 = vsel %vm840, %v1532, 0
    %v1586 = vsel %vm840, %v1533, 0
    %v1589 = vsel %vm840, %v1534, 0
    %v1592 = vsel %vm840, %v1535, 0
    %v1595 = vsel %vm840, %v1536, 0
    %v1598 = vsel %vm840, %v1537, 0
    %v1601 = vsel %vm840, %v1538, 0
    %v1604 = vsel %vm840, %v1539, 0
    %v1607 = vsel %vm840, %v1540, 0
    %v1610 = vsel %vm840, %v1541, 0
    %v1613 = vsel %vm840, %v1542, 0
    %v1616 = vsel %vm840, %v1543, 0
    %v1619 = vsel %vm840, %v1544, 0
    %v1622 = vsel %vm840, %v1545, 0
    %v1625 = vsel %vm840, %v1546, 0
    %v1628 = vsel %vm840, %v1547, 0
    %v1631 = vsel %vm840, %v1548, 0
    %v1634 = vsel %vm840, %v1549, 0
    %v1637 = vsel %vm840, %v1550, 0
    %v1640 = vsel %vm840, %v1551, 0
    %v1643 = vsel %vm840, %v1552, 0
    %v1646 = vsel %vm840, %v1553, 0
    %v1649 = vsel %vm840, %v1554, 0
    %v1652 = vsel %vm840, %v1555, 0
    %v1655 = vsel %vm840, %v1556, 0
    %v1658 = vsel %vm840, %v1557, 0
    %1660 = vmatprep.subr.mxu0 0.0
    %1661 = vmatpush1.xpose.msra.mxu0 %v1610
    %1662 = vmatprep.subr.mxu0 0.0
    %1663 = vmatpush1.xpose.msra.mxu0 %v1607
    %1664 = vmatprep.subr.mxu0 0.0
    %1665 = vmatpush1.xpose.msra.mxu0 %v1604
    %1666 = vmatprep.subr.mxu0 0.0
    %1667 = vmatpush1.xpose.msra.mxu0 %v1601
    %1668 = vmatprep.subr.mxu0 0.0
    %1669 = vmatpush1.xpose.msra.mxu0 %v1598
    %1670 = vmatprep.subr.mxu0 0.0
    %1671 = vmatpush1.xpose.msra.mxu0 %v1595
    %1672 = vmatprep.subr.mxu0 0.0
    %1673 = vmatpush1.xpose.msra.mxu0 %v1592
    %1674 = vmatprep.subr.mxu0 0.0
    %1675 = vmatpush1.xpose.msra.mxu0 %v1589
    %1676 = vmatprep.subr.mxu0 0.0
    %1677 = vmatpush1.xpose.msra.mxu0 %v1586
    %1678 = vmatprep.subr.mxu0 0.0
    %1679 = vmatpush1.xpose.msra.mxu0 %v1583
    %1680 = vmatprep.subr.mxu0 0.0
    %1681 = vmatpush1.xpose.msra.mxu0 %v1580
    %1682 = vmatprep.subr.mxu0 0.0
    %1683 = vmatpush1.xpose.msra.mxu0 %v1577
    %1684 = vmatprep.subr.mxu0 0.0
    %1685 = vmatpush1.xpose.msra.mxu0 %v1574
    %1686 = vmatprep.subr.mxu0 0.0
    %1687 = vmatpush1.xpose.msra.mxu0 %v1571
    %1688 = vmatprep.subr.mxu0 0.0
    %1689 = vmatpush1.xpose.msra.mxu0 %v1568
    %1690 = vmatprep.subr.mxu0 0.0
    %1691 = vmatpush1.xpose.msra.mxu0 %v1565
    %1692 = vmatprep.subr.mxu0 0.0
    %1693 = vmatpush2.xpose.msra.mxu0 %v1658
    %1694 = vmatprep.subr.mxu0 0.0
    %1695 = vmatpush2.xpose.msra.mxu0 %v1655
    %1696 = vmatprep.subr.mxu0 0.0
    %1697 = vmatpush2.xpose.msra.mxu0 %v1652
    %1698 = vmatprep.subr.mxu0 0.0
    %1699 = vmatpush2.xpose.msra.mxu0 %v1649
    %1700 = vmatprep.subr.mxu0 0.0
    %1701 = vmatpush2.xpose.msra.mxu0 %v1646
    %1702 = vmatprep.subr.mxu0 0.0
    %1703 = vmatpush2.xpose.msra.mxu0 %v1643
    %1704 = vmatprep.subr.mxu0 0.0
    %1705 = vmatpush2.xpose.msra.mxu0 %v1640
    %1706 = vmatprep.subr.mxu0 0.0
    %1707 = vmatpush2.xpose.msra.mxu0 %v1637
    %1708 = vmatprep.subr.mxu0 0.0
    %1709 = vmatpush2.xpose.msra.mxu0 %v1634
    %1710 = vmatprep.subr.mxu0 0.0
    %1711 = vmatpush2.xpose.msra.mxu0 %v1631
    %1712 = vmatprep.subr.mxu0 0.0
    %1713 = vmatpush2.xpose.msra.mxu0 %v1628
    %1714 = vmatprep.subr.mxu0 0.0
    %1715 = vmatpush2.xpose.msra.mxu0 %v1625
    %1716 = vmatprep.subr.mxu0 0.0
    %1717 = vmatpush2.xpose.msra.mxu0 %v1622
    %1718 = vmatprep.subr.mxu0 0.0
    %1719 = vmatpush2.xpose.msra.mxu0 %v1619
    %1720 = vmatprep.subr.mxu0 0.0
    %1721 = vmatpush2.xpose.msra.mxu0 %v1616
    %1722 = vmatprep.subr.mxu0 0.0
    %1723 = vmatpush2.xpose.msra.mxu0 %v1613
    %1724 = vmatprep.mubr.f32.mxu0 0.0
    %1725 = vmatmul.mubr.f32.gmra.mxu0 %v1562
    %v1726 = vpop.f32.mrf.mxu0
    %v1727 = vadd.f32 %v1560, %v1726
    %v1728 = vpop.f32.mrf.mxu0
    %v1729 = vadd.f32 %v1560, %v1728
    %1730 = vdwg.mxu0
    %v1733 = vcombine.low %v1727, %v1729
    %v1735 = vunpack.c.l.s4 1966171168
    %v1736 = vunpack.c.0.s8 %v1735
    %v1737 = vlaneseq
    %v1738 = vshrl.u32 %v1737, 7
    %v1739 = vsub.s32 %v1736, %v1738
    %v1740 = vrot.slane %v1733, %v1739
    %v1742 = vunpack.c.l.s4 1966171168
    %v1743 = vunpack.c.0.s8 %v1742
    %v1744 = vlaneseq
    %v1745 = vshrl.u32 %v1744, 7
    %v1746 = vsub.s32 %v1743, %v1745
    %v1747 = vrot.slane %v1740, %v1746
    %v1749 = vlaneseq
    %vm1750 = vcmp.ge.s32.totalorder %v1749, 0
    %vm1751 = vcmp.lt.s32.totalorder %v1749, 256
    %vm1752 = vmand %vm1750, %vm1751
    %1753 = vst.msk [vmem:[#allocation3] sm:$0x3] %vm1752, %v1747
    // Predicated region
    $region46: #{tpu_custom_call.1} parent=1 // pred_check
      _
    $region47: #{tpu_custom_call.1} parent=1 // pred_check_branch
      %1755 = sbr.rel (0) target = $region49
    $region48: #{tpu_custom_call.1} parent=1 // pred_region
      %s1757 = ssub.s32 32, 32
      %1758 = vsyncadd [#allocation4], %s1757
      %s1760 = sshll.u32 [#allocation3], 4
      %s1761 = int_to_ptr.vmem [resolvable:$true] %s1760
      %1763 = dma.vmem_to_hbm [thread:$0]  %s1761, 32, %s11, [#allocation4]
    $region49: #{tpu_custom_call.1} parent=1 // pred_fallthru
      _
    // Predicated region
    $region50: #{tpu_custom_call.1} parent=1 // pred_check
      _
    $region51: #{tpu_custom_call.1} parent=1 // pred_check_branch
      %1765 = sbr.rel (0) target = $region53
    $region52: #{tpu_custom_call.1} parent=1 // pred_region
      %1766 = dma.done [#allocation4], 32
    $region53: #{tpu_custom_call.1} parent=1 // pred_fallthru
      _
    %1767 = vsyncpa [#allocation4], 1

</llo_original>
